<compile_context>
chip_gen: v7x
topology: tpu7x:2x2x1
jax: 0.10.0
libtpu: 0.0.40
codegen_flags: <defaults>
</compile_context>

<pallas_src>
import functools

import jax
import jax.numpy as jnp
from jax.experimental import pallas as pl
from jax.experimental.pallas import tpu as pltpu

EPS = 1e-5   # PyTorch BatchNorm2d default


def _round_up(x, m):
    return (x + m - 1) // m * m


def _vmem_limit_bytes():
    try:
        kind = jax.devices()[0].device_kind.lower()
    except Exception:
        kind = ""
    if "v5" in kind or "v6" in kind:
        return 96 * 1024 * 1024    # 128 MiB physical VMEM on v5e/v6e
    return 32 * 1024 * 1024        # conservative elsewhere (v7x: 64 MiB physical)


# ---------------------------------------------------------------------------
# Pallas kernels
# ---------------------------------------------------------------------------
def _make_conv_stats_kernel_stride1(tap_offsets, rows):
    """In-kernel im2col: kh*kw shifted bf16 MXU matmuls, f32 accumulation,
    fused per-channel sum / sum-of-squares over the valid output rows."""

    def kernel(x_ref, w_ref, mask_ref, y_ref, s_ref, q_ref):
        @pl.when(pl.program_id(1) == 0)
        def _init():
            s_ref[...] = jnp.zeros_like(s_ref)
            q_ref[...] = jnp.zeros_like(q_ref)

        acc = None
        for t, off in enumerate(tap_offsets):          # static unroll (kh*kw taps)
            lhs = x_ref[0, pl.ds(off, rows), :]        # (rows, C_in) bf16
            part = jnp.dot(lhs, w_ref[t], preferred_element_type=jnp.float32)
            acc = part if acc is None else acc + part

        y_ref[0, :, :] = acc.astype(y_ref.dtype)

        valid = acc * mask_ref[...]                    # zero out non-output rows
        s_ref[...] += jnp.sum(valid, axis=0, keepdims=True)
        q_ref[...] += jnp.sum(valid * acc, axis=0, keepdims=True)

    return kernel


def _conv_stats_kernel_patches(p_ref, w_ref, y_ref, s_ref, q_ref):
    """stride>1 fallback: patch matmul + fused stats (zero-padded rows add 0)."""
    @pl.when(pl.program_id(0) == 0)
    def _init():
        s_ref[...] = jnp.zeros_like(s_ref)
        q_ref[...] = jnp.zeros_like(q_ref)

    y = jnp.dot(p_ref[...], w_ref[...], preferred_element_type=jnp.float32)
    y_ref[...] = y.astype(y_ref.dtype)
    s_ref[...] += jnp.sum(y, axis=0, keepdims=True)
    q_ref[...] += jnp.sum(y * y, axis=0, keepdims=True)


def _make_bn_normalize_kernel(inv_m):
    """out = (y - mean) * rsqrt(var + eps) * gamma + beta  (f32 math, bf16 y)."""

    def kernel(y_ref, s_ref, q_ref, g_ref, b_ref, o_ref):
        mean = s_ref[...] * inv_m
        var = jnp.maximum(q_ref[...] * inv_m - mean * mean, 0.0)
        scale = g_ref[...] * jax.lax.rsqrt(var + EPS)
        shift = b_ref[...] - mean * scale
        o_ref[...] = (y_ref[...].astype(jnp.float32) * scale + shift
                      ).astype(o_ref.dtype)

    return kernel


# ---------------------------------------------------------------------------
# stride == 1 path: in-kernel im2col (shifted matmuls over a flattened image)
# ---------------------------------------------------------------------------
def _relu_conv_bn_stride1(x, weight, gamma, beta, padding, vmem_limit):
    N, C_in, H, W = x.shape
    C_out, _, kh, kw = weight.shape
    p = padding
    Hp, Wp = H + 2 * p, W + 2 * p
    Ho, Wo = Hp - kh + 1, Wp - kw + 1
    R = Hp * Wp                                    # "full output" rows per image
    R_pad = (Hp + kh) * Wp                         # + room for largest tap shift
    C_pad = _round_up(C_out, 128)
    if C_pad <= 512:
        TC = C_pad
    else:
        TC = 256 if C_pad % 256 == 0 else 128
    n_ct = C_pad // TC

    # ReLU in f32 (v5e has no bf16 VPU), then bf16 for the MXU / HBM streams.
    xr = jnp.maximum(x, 0.0).astype(jnp.bfloat16)
    x_nhwc = jnp.transpose(xr, (0, 2, 3, 1))
    x_padded = jnp.pad(x_nhwc, ((0, 0), (p, p + kh), (p, p), (0, 0)))
    x_flat = x_padded.reshape(N, R_pad, C_in)

    # Weight taps: (kh*kw, C_in, C_pad), tap index t = i*kw + j.
    w_taps = jnp.transpose(weight.astype(jnp.bfloat16), (2, 3, 1, 0))
    w_taps = w_taps.reshape(kh * kw, C_in, C_out)
    w_taps = jnp.pad(w_taps, ((0, 0), (0, 0), (0, C_pad - C_out)))

    # Rows of the "full output" that are real conv outputs (hp < Ho, wp < Wo).
    hp = jnp.arange(Hp)[:, None]
    wp = jnp.arange(Wp)[None, :]
    mask = ((hp < Ho) & (wp < Wo)).astype(jnp.float32).reshape(R, 1)

    tap_offsets = tuple(i * Wp + j for i in range(kh) for j in range(kw))
    gamma_p = jnp.pad(gamma.astype(jnp.float32).reshape(1, C_out),
                      ((0, 0), (0, C_pad - C_out)))
    beta_p = jnp.pad(beta.astype(jnp.float32).reshape(1, C_out),
                     ((0, 0), (0, C_pad - C_out)))
    m_valid = N * Ho * Wo

    # --- pass 1: conv (in-kernel im2col) + fused BN statistics -------------
    y, csum, csq = pl.pallas_call(
        _make_conv_stats_kernel_stride1(tap_offsets, R),
        out_shape=(
            jax.ShapeDtypeStruct((N, R, C_pad), jnp.bfloat16),   # conv output
            jax.ShapeDtypeStruct((1, C_pad), jnp.float32),       # channel sum
            jax.ShapeDtypeStruct((1, C_pad), jnp.float32),       # channel sumsq
        ),
        grid=(n_ct, N),
        in_specs=[
            pl.BlockSpec((1, R_pad, C_in), lambda c, n: (n, 0, 0)),
            pl.BlockSpec((kh * kw, C_in, TC), lambda c, n: (0, 0, c)),
            pl.BlockSpec((R, 1), lambda c, n: (0, 0)),
        ],
        out_specs=(
            pl.BlockSpec((1, R, TC), lambda c, n: (n, 0, c)),
            pl.BlockSpec((1, TC), lambda c, n: (0, c)),          # resident acc
            pl.BlockSpec((1, TC), lambda c, n: (0, c)),          # resident acc
        ),
        compiler_params=pltpu.CompilerParams(
            dimension_semantics=("parallel", "arbitrary"),
            vmem_limit_bytes=vmem_limit),
        cost_estimate=pl.CostEstimate(
            flops=2 * N * R * kh * kw * C_in * C_pad,
            transcendentals=0,
            bytes_accessed=(n_ct * N * R_pad * C_in * 2
                            + kh * kw * C_in * C_pad * 2
                            + N * R * C_pad * 2)),
    )(x_flat, w_taps, mask)

    # --- pass 2: streaming BatchNorm normalize (bf16 in, f32 out) ----------
    out_full = pl.pallas_call(
        _make_bn_normalize_kernel(1.0 / m_valid),
        out_shape=jax.ShapeDtypeStruct((N, R, C_pad), jnp.float32),
        grid=(n_ct, N),
        in_specs=[
            pl.BlockSpec((1, R, TC), lambda c, n: (n, 0, c)),
            pl.BlockSpec((1, TC), lambda c, n: (0, c)),
            pl.BlockSpec((1, TC), lambda c, n: (0, c)),
            pl.BlockSpec((1, TC), lambda c, n: (0, c)),
            pl.BlockSpec((1, TC), lambda c, n: (0, c)),
        ],
        out_specs=pl.BlockSpec((1, R, TC), lambda c, n: (n, 0, c)),
        compiler_params=pltpu.CompilerParams(
            dimension_semantics=("parallel", "parallel"),
            vmem_limit_bytes=vmem_limit),
    )(y, csum, csq, gamma_p, beta_p)

    # TODO(synk): emit NHWC / bf16 directly when the consumer allows it and
    #             skip this XLA slice + transpose back to NCHW f32.
    out = out_full.reshape(N, Hp, Wp, C_pad)[:, :Ho, :Wo, :C_out]
    return jnp.transpose(out, (0, 3, 1, 2))


# ---------------------------------------------------------------------------
# stride > 1 fallback: wrapper im2col + same matmul/stats + normalize kernels
# ---------------------------------------------------------------------------
def _im2col(x, kh, kw, stride, padding):
    N, C, H, W = x.shape
    xp = jnp.pad(x, ((0, 0), (0, 0), (padding, padding), (padding, padding)))
    Ho = (H + 2 * padding - kh) // stride + 1
    Wo = (W + 2 * padding - kw) // stride + 1
    cols = []
    for i in range(kh):
        for j in range(kw):
            cols.append(xp[:, :, i:i + stride * Ho:stride, j:j + stride * Wo:stride])
    cols = jnp.stack(cols, axis=-1)                        # (N, C, Ho, Wo, kh*kw)
    patches = cols.transpose(0, 2, 3, 1, 4).reshape(N * Ho * Wo, C * kh * kw)
    return patches, Ho, Wo


def _relu_conv_bn_general(x, weight, gamma, beta, stride, padding, vmem_limit):
    N, C_in, H, W = x.shape
    C_out, _, kh, kw = weight.shape

    xr = jnp.maximum(x, 0.0).astype(jnp.bfloat16)
    patches, Ho, Wo = _im2col(xr, kh, kw, stride, padding)
    M, K = patches.shape
    C_pad = _round_up(C_out, 128)
    TM = min(512, _round_up(M, 8))
    M_pad = _round_up(M, TM)
    G = M_pad // TM
    if M_pad != M:
        patches = jnp.pad(patches, ((0, M_pad - M), (0, 0)))

    w_mat = jnp.pad(weight.reshape(C_out, K).T.astype(jnp.bfloat16),
                    ((0, 0), (0, C_pad - C_out)))
    gamma_p = jnp.pad(gamma.astype(jnp.float32).reshape(1, C_out),
                      ((0, 0), (0, C_pad - C_out)))
    beta_p = jnp.pad(beta.astype(jnp.float32).reshape(1, C_out),
                     ((0, 0), (0, C_pad - C_out)))

    y, csum, csq = pl.pallas_call(
        _conv_stats_kernel_patches,
        out_shape=(
            jax.ShapeDtypeStruct((M_pad, C_pad), jnp.bfloat16),
            jax.ShapeDtypeStruct((1, C_pad), jnp.float32),
            jax.ShapeDtypeStruct((1, C_pad), jnp.float32),
        ),
        grid=(G,),
        in_specs=[
            pl.BlockSpec((TM, K), lambda i: (i, 0)),
            pl.BlockSpec((K, C_pad), lambda i: (0, 0)),
        ],
        out_specs=(
            pl.BlockSpec((TM, C_pad), lambda i: (i, 0)),
            pl.BlockSpec((1, C_pad), lambda i: (0, 0)),
            pl.BlockSpec((1, C_pad), lambda i: (0, 0)),
        ),
        compiler_params=pltpu.CompilerParams(
            dimension_semantics=("arbitrary",),
            vmem_limit_bytes=vmem_limit),
    )(patches, w_mat)

    out = pl.pallas_call(
        _make_bn_normalize_kernel(1.0 / M),
        out_shape=jax.ShapeDtypeStruct((M_pad, C_pad), jnp.float32),
        grid=(G,),
        in_specs=[pl.BlockSpec((TM, C_pad), lambda i: (i, 0))]
        + [pl.BlockSpec((1, C_pad), lambda i: (0, 0))] * 4,
        out_specs=pl.BlockSpec((TM, C_pad), lambda i: (i, 0)),
        compiler_params=pltpu.CompilerParams(
            dimension_semantics=("parallel",),
            vmem_limit_bytes=vmem_limit),
    )(y, csum, csq, gamma_p, beta_p)

    out = out[:M, :C_out].reshape(N, Ho, Wo, C_out)
    return jnp.transpose(out, (0, 3, 1, 2))


# ---------------------------------------------------------------------------
# Public entry point
# ---------------------------------------------------------------------------
@functools.partial(jax.jit, static_argnames=("stride", "padding"))
def relu_conv_bn(x, weight, gamma, beta, *, stride, padding):
    """x: (N, C_in, H, W) f32 NCHW; weight: (C_out, C_in, kh, kw). NCHW f32 out.
    For affine=False pass gamma=ones, beta=zeros."""
    vmem_limit = _vmem_limit_bytes()
    if stride == 1:
        return _relu_conv_bn_stride1(x, weight, gamma, beta, padding, vmem_limit)
    return _relu_conv_bn_general(x, weight, gamma, beta, stride, padding, vmem_limit)


# ---------------------------------------------------------------------------
# Pure-JAX reference (same bf16-input conv / bf16 intermediate precision)
# ---------------------------------------------------------------------------
def reference(x, weight, gamma, beta, stride, padding):
    xr = jnp.maximum(x, 0.0).astype(jnp.bfloat16)
    conv = jax.lax.conv_general_dilated(
        xr, weight.astype(jnp.bfloat16), (stride, stride),
        [(padding, padding), (padding, padding)],
        dimension_numbers=("NCHW", "OIHW", "NCHW"),
        preferred_element_type=jnp.float32)
    mean = conv.mean(axis=(0, 2, 3), keepdims=True)
    var = ((conv - mean) ** 2).mean(axis=(0, 2, 3), keepdims=True)
    # The Pallas pipeline stores the conv output in bf16 between its two passes
    # (statistics stay f32); quantize the reference identically so tolerances
    # check only the kernel's accumulation differences.
    convq = conv.astype(jnp.bfloat16).astype(jnp.float32)
    return (convq - mean) * jax.lax.rsqrt(var + EPS) * gamma.reshape(1, -1, 1, 1) \
        + beta.reshape(1, -1, 1, 1)


if __name__ == "__main__":
    key = jax.random.PRNGKey(0)
    N, C_in, C_out, H, W = 2, 4, 8, 16, 16

    kx, kw_, kg, kb = jax.random.split(key, 4)
    x = jax.random.normal(kx, (N, C_in, H, W), dtype=jnp.float32)
    gamma = 1.0 + 0.1 * jax.random.normal(kg, (C_out,), dtype=jnp.float32)
    beta = 0.1 * jax.random.normal(kb, (C_out,), dtype=jnp.float32)

    # (kernel_size, stride, padding) configs typical for ReLUConvBN.
    for (ks, stride, padding) in [(1, 1, 0), (3, 1, 1), (3, 2, 1)]:
        weight = 0.1 * jax.random.normal(kw_, (C_out, C_in, ks, ks),
                                         dtype=jnp.float32)
        out = jax.block_until_ready(
            relu_conv_bn(x, weight, gamma, beta, stride=stride, padding=padding))

        ref = reference(x, weight, gamma, beta, stride, padding)
        assert out.shape == ref.shape, (out.shape, ref.shape)
        err = float(jnp.max(jnp.abs(out - ref)))
        assert jnp.allclose(out, ref, atol=2e-3, rtol=2e-3), err

    print("KERNEL_OK")
</pallas_src>

<mosaic_0001>
module attributes {stable_mosaic.version = 11 : i64} {
  func.func @kernel(%arg0: i32, %arg1: i32, %arg2: memref<1x256x128xbf16, #tpu.memory_space<vmem>>, %arg3: memref<1x128xf32, #tpu.memory_space<vmem>>, %arg4: memref<1x128xf32, #tpu.memory_space<vmem>>, %arg5: memref<1x128xf32, #tpu.memory_space<vmem>>, %arg6: memref<1x128xf32, #tpu.memory_space<vmem>>, %arg7: memref<1x256x128xf32, #tpu.memory_space<vmem>>) attributes {dimension_semantics = [#tpu.dimension_semantics<parallel>, #tpu.dimension_semantics<parallel>], iteration_bounds = array<i64: 1, 2>, scalar_prefetch = 0 : i64, scratch_operands = 0 : i64, tpu.core_type = #tpu.core_type<tc>, window_params = [{transform_indices = @transform_0, window_bounds = array<i64: 1, 256, 128>}, {transform_indices = @transform_1, window_bounds = array<i64: 1, 128>}, {transform_indices = @transform_2, window_bounds = array<i64: 1, 128>}, {transform_indices = @transform_3, window_bounds = array<i64: 1, 128>}, {transform_indices = @transform_4, window_bounds = array<i64: 1, 128>}, {transform_indices = @transform_5, window_bounds = array<i64: 1, 256, 128>}]} {
    %c0 = arith.constant 0 : index
    %c0_0 = arith.constant 0 : index
    %0 = vector.load %arg3[%c0, %c0_0] : memref<1x128xf32, #tpu.memory_space<vmem>>, vector<1x128xf32>
    %cst = arith.constant 0.001953125 : f32
    %1 = vector.broadcast %cst : f32 to vector<1x128xf32>
    %2 = arith.mulf %0, %1 : vector<1x128xf32>
    %c0_1 = arith.constant 0 : index
    %c0_2 = arith.constant 0 : index
    %3 = vector.load %arg4[%c0_1, %c0_2] : memref<1x128xf32, #tpu.memory_space<vmem>>, vector<1x128xf32>
    %cst_3 = arith.constant 0.001953125 : f32
    %4 = vector.broadcast %cst_3 : f32 to vector<1x128xf32>
    %5 = arith.mulf %3, %4 : vector<1x128xf32>
    %6 = arith.mulf %2, %2 : vector<1x128xf32>
    %7 = arith.subf %5, %6 : vector<1x128xf32>
    %cst_4 = arith.constant 0.000000e+00 : f32
    %8 = vector.broadcast %cst_4 : f32 to vector<1x128xf32>
    %9 = arith.maximumf %7, %8 : vector<1x128xf32>
    %c0_5 = arith.constant 0 : index
    %c0_6 = arith.constant 0 : index
    %10 = vector.load %arg5[%c0_5, %c0_6] : memref<1x128xf32, #tpu.memory_space<vmem>>, vector<1x128xf32>
    %cst_7 = arith.constant 9.99999974E-6 : f32
    %11 = vector.broadcast %cst_7 : f32 to vector<1x128xf32>
    %12 = arith.addf %9, %11 : vector<1x128xf32>
    %13 = math.rsqrt %12 : vector<1x128xf32>
    %14 = arith.mulf %10, %13 : vector<1x128xf32>
    %c0_8 = arith.constant 0 : index
    %c0_9 = arith.constant 0 : index
    %15 = vector.load %arg6[%c0_8, %c0_9] : memref<1x128xf32, #tpu.memory_space<vmem>>, vector<1x128xf32>
    %16 = arith.mulf %2, %14 : vector<1x128xf32>
    %17 = arith.subf %15, %16 : vector<1x128xf32>
    %c0_10 = arith.constant 0 : index
    %c0_11 = arith.constant 0 : index
    %c0_12 = arith.constant 0 : index
    %18 = vector.load %arg2[%c0_10, %c0_11, %c0_12] : memref<1x256x128xbf16, #tpu.memory_space<vmem>>, vector<1x256x128xbf16>
    %19 = arith.extf %18 : vector<1x256x128xbf16> to vector<1x256x128xf32>
    %20 = vector.shape_cast %14 : vector<1x128xf32> to vector<1x1x128xf32>
    %21 = vector.broadcast %20 : vector<1x1x128xf32> to vector<1x256x128xf32>
    %22 = arith.mulf %19, %21 : vector<1x256x128xf32>
    %23 = vector.shape_cast %17 : vector<1x128xf32> to vector<1x1x128xf32>
    %24 = vector.broadcast %23 : vector<1x1x128xf32> to vector<1x256x128xf32>
    %25 = arith.addf %22, %24 : vector<1x256x128xf32>
    %c0_13 = arith.constant 0 : index
    %c0_14 = arith.constant 0 : index
    %c0_15 = arith.constant 0 : index
    %26 = vector.load %arg7[%c0_13, %c0_14, %c0_15] : memref<1x256x128xf32, #tpu.memory_space<vmem>>, vector<1x256x128xf32>
    tpu.vector_store %arg7[%c0_13, %c0_14, %c0_15], %25 {strides = array<i32>} : memref<1x256x128xf32, #tpu.memory_space<vmem>>, vector<1x256x128xf32>,
    return
  }
  func.func @transform_0(%arg0: i32, %arg1: i32) -> (i32, i32, i32) {
    %c0_i32 = arith.constant 0 : i32
    %c0_i32_0 = arith.constant 0 : i32
    return %arg1, %c0_i32, %arg0 : i32, i32, i32
  }
  func.func @transform_1(%arg0: i32, %arg1: i32) -> (i32, i32) {
    %c0_i32 = arith.constant 0 : i32
    %c0_i32_0 = arith.constant 0 : i32
    return %c0_i32, %arg0 : i32, i32
  }
  func.func @transform_2(%arg0: i32, %arg1: i32) -> (i32, i32) {
    %c0_i32 = arith.constant 0 : i32
    %c0_i32_0 = arith.constant 0 : i32
    return %c0_i32, %arg0 : i32, i32
  }
  func.func @transform_3(%arg0: i32, %arg1: i32) -> (i32, i32) {
    %c0_i32 = arith.constant 0 : i32
    %c0_i32_0 = arith.constant 0 : i32
    return %c0_i32, %arg0 : i32, i32
  }
  func.func @transform_4(%arg0: i32, %arg1: i32) -> (i32, i32) {
    %c0_i32 = arith.constant 0 : i32
    %c0_i32_0 = arith.constant 0 : i32
    return %c0_i32, %arg0 : i32, i32
  }
  func.func @transform_5(%arg0: i32, %arg1: i32) -> (i32, i32, i32) {
    %c0_i32 = arith.constant 0 : i32
    %c0_i32_0 = arith.constant 0 : i32
    return %arg1, %c0_i32, %arg0 : i32, i32, i32
  }
}

module attributes {stable_mosaic.version = 11 : i64} {
  func.func @kernel(%arg0: i32, %arg1: i32, %arg2: memref<1x272x4xbf16, #tpu.memory_space<vmem>>, %arg3: memref<1x4x128xbf16, #tpu.memory_space<vmem>>, %arg4: memref<256x1xf32, #tpu.memory_space<vmem>>, %arg5: memref<1x256x128xbf16, #tpu.memory_space<vmem>>, %arg6: memref<1x128xf32, #tpu.memory_space<vmem>>, %arg7: memref<1x128xf32, #tpu.memory_space<vmem>>) attributes {dimension_semantics = [#tpu.dimension_semantics<parallel>, #tpu.dimension_semantics<arbitrary>], iteration_bounds = array<i64: 1, 2>, scalar_prefetch = 0 : i64, scratch_operands = 0 : i64, tpu.core_type = #tpu.core_type<tc>, window_params = [{transform_indices = @transform_0, window_bounds = array<i64: 1, 272, 4>}, {transform_indices = @transform_1, window_bounds = array<i64: 1, 4, 128>}, {pipeline_mode = #tpu.pipeline_mode<synchronous>, transform_indices = @transform_2, window_bounds = array<i64: 256, 1>}, {transform_indices = @transform_3, window_bounds = array<i64: 1, 256, 128>}, {transform_indices = @transform_4, window_bounds = array<i64: 1, 128>}, {transform_indices = @transform_5, window_bounds = array<i64: 1, 128>}]} {
    %c0_i32 = arith.constant 0 : i32
    %0 = arith.cmpi eq, %arg1, %c0_i32 : i32
    %1 = arith.extui %0 : i1 to i32
    %c0_i32_0 = arith.constant 0 : i32
    %2 = arith.cmpi ne, %1, %c0_i32_0 : i32
    scf.if %2 {
      %cst_21 = arith.constant 0.000000e+00 : f32
      %26 = vector.broadcast %cst_21 : f32 to vector<1x128xf32>
      %c0_22 = arith.constant 0 : index
      %c0_23 = arith.constant 0 : index
      %27 = vector.load %arg6[%c0_22, %c0_23] : memref<1x128xf32, #tpu.memory_space<vmem>>, vector<1x128xf32>
      tpu.vector_store %arg6[%c0_22, %c0_23], %26 {strides = array<i32>} : memref<1x128xf32, #tpu.memory_space<vmem>>, vector<1x128xf32>,
      %cst_24 = arith.constant 0.000000e+00 : f32
      %28 = vector.broadcast %cst_24 : f32 to vector<1x128xf32>
      %c0_25 = arith.constant 0 : index
      %c0_26 = arith.constant 0 : index
      %29 = vector.load %arg7[%c0_25, %c0_26] : memref<1x128xf32, #tpu.memory_space<vmem>>, vector<1x128xf32>
      tpu.vector_store %arg7[%c0_25, %c0_26], %28 {strides = array<i32>} : memref<1x128xf32, #tpu.memory_space<vmem>>, vector<1x128xf32>,
    } else {
    }
    %c0 = arith.constant 0 : index
    %c0_1 = arith.constant 0 : index
    %c0_2 = arith.constant 0 : index
    %3 = vector.load %arg2[%c0, %c0_1, %c0_2] : memref<1x272x4xbf16, #tpu.memory_space<vmem>>, vector<1x256x4xbf16>
    %4 = vector.shape_cast %3 : vector<1x256x4xbf16> to vector<256x4xbf16>
    %c0_3 = arith.constant 0 : index
    %c0_4 = arith.constant 0 : index
    %c0_5 = arith.constant 0 : index
    %5 = vector.load %arg3[%c0_3, %c0_4, %c0_5] : memref<1x4x128xbf16, #tpu.memory_space<vmem>>, vector<1x4x128xbf16>
    %6 = vector.shape_cast %5 : vector<1x4x128xbf16> to vector<4x128xbf16>
    %cst = arith.constant dense<0.000000e+00> : vector<256x128xf32>
    %7 = tpu.matmul %4, %6, %cst {dimension_numbers = #tpu.dot_dimension_numbers<[1], [0], [0], [1], [0, 0, 1, 1], [], []>} : vector<256x4xbf16>, vector<4x128xbf16>, vector<256x128xf32> -> vector<256x128xf32>
    %8 = arith.truncf %7 : vector<256x128xf32> to vector<256x128xbf16>
    %c0_6 = arith.constant 0 : index
    %c0_7 = arith.constant 0 : index
    %c0_8 = arith.constant 0 : index
    %9 = vector.load %arg5[%c0_6, %c0_7, %c0_8] : memref<1x256x128xbf16, #tpu.memory_space<vmem>>, vector<1x256x128xbf16>
    %10 = vector.shape_cast %9 : vector<1x256x128xbf16> to vector<256x128xbf16>
    %11 = vector.shape_cast %8 : vector<256x128xbf16> to vector<1x256x128xbf16>
    tpu.vector_store %arg5[%c0_6, %c0_7, %c0_8], %11 {strides = array<i32>} : memref<1x256x128xbf16, #tpu.memory_space<vmem>>, vector<1x256x128xbf16>,
    %c0_9 = arith.constant 0 : index
    %c0_10 = arith.constant 0 : index
    %12 = vector.load %arg4[%c0_9, %c0_10] : memref<256x1xf32, #tpu.memory_space<vmem>>, vector<256x1xf32>
    %13 = vector.broadcast %12 : vector<256x1xf32> to vector<256x128xf32>
    %14 = arith.mulf %7, %13 : vector<256x128xf32>
    %c0_11 = arith.constant 0 : index
    %c0_12 = arith.constant 0 : index
    %15 = vector.load %arg6[%c0_11, %c0_12] : memref<1x128xf32, #tpu.memory_space<vmem>>, vector<1x128xf32>
    %cst_13 = arith.constant dense<0.000000e+00> : vector<128xf32>
    %16 = vector.multi_reduction <add>, %14, %cst_13 [0] : vector<256x128xf32> to vector<128xf32>
    %17 = vector.shape_cast %16 : vector<128xf32> to vector<1x128xf32>
    %18 = arith.addf %15, %17 : vector<1x128xf32>
    %c0_14 = arith.constant 0 : index
    %c0_15 = arith.constant 0 : index
    %19 = vector.load %arg6[%c0_14, %c0_15] : memref<1x128xf32, #tpu.memory_space<vmem>>, vector<1x128xf32>
    tpu.vector_store %arg6[%c0_14, %c0_15], %18 {strides = array<i32>} : memref<1x128xf32, #tpu.memory_space<vmem>>, vector<1x128xf32>,
    %c0_16 = arith.constant 0 : index
    %c0_17 = arith.constant 0 : index
    %20 = vector.load %arg7[%c0_16, %c0_17] : memref<1x128xf32, #tpu.memory_space<vmem>>, vector<1x128xf32>
    %21 = arith.mulf %14, %7 : vector<256x128xf32>
    %cst_18 = arith.constant dense<0.000000e+00> : vector<128xf32>
    %22 = vector.multi_reduction <add>, %21, %cst_18 [0] : vector<256x128xf32> to vector<128xf32>
    %23 = vector.shape_cast %22 : vector<128xf32> to vector<1x128xf32>
    %24 = arith.addf %20, %23 : vector<1x128xf32>
    %c0_19 = arith.constant 0 : index
    %c0_20 = arith.constant 0 : index
    %25 = vector.load %arg7[%c0_19, %c0_20] : memref<1x128xf32, #tpu.memory_space<vmem>>, vector<1x128xf32>
    tpu.vector_store %arg7[%c0_19, %c0_20], %24 {strides = array<i32>} : memref<1x128xf32, #tpu.memory_space<vmem>>, vector<1x128xf32>,
    return
  }
  func.func @transform_0(%arg0: i32, %arg1: i32) -> (i32, i32, i32) {
    %c0_i32 = arith.constant 0 : i32
    %c0_i32_0 = arith.constant 0 : i32
    %c0_i32_1 = arith.constant 0 : i32
    return %arg1, %c0_i32, %c0_i32_0 : i32, i32, i32
  }
  func.func @transform_1(%arg0: i32, %arg1: i32) -> (i32, i32, i32) {
    %c0_i32 = arith.constant 0 : i32
    %c0_i32_0 = arith.constant 0 : i32
    %c0_i32_1 = arith.constant 0 : i32
    return %c0_i32, %c0_i32_0, %arg0 : i32, i32, i32
  }
  func.func @transform_2(%arg0: i32, %arg1: i32) -> (i32, i32) {
    %c0_i32 = arith.constant 0 : i32
    %c0_i32_0 = arith.constant 0 : i32
    %c0_i32_1 = arith.constant 0 : i32
    return %c0_i32, %c0_i32_0 : i32, i32
  }
  func.func @transform_3(%arg0: i32, %arg1: i32) -> (i32, i32, i32) {
    %c0_i32 = arith.constant 0 : i32
    %c0_i32_0 = arith.constant 0 : i32
    return %arg1, %c0_i32, %arg0 : i32, i32, i32
  }
  func.func @transform_4(%arg0: i32, %arg1: i32) -> (i32, i32) {
    %c0_i32 = arith.constant 0 : i32
    %c0_i32_0 = arith.constant 0 : i32
    return %c0_i32, %arg0 : i32, i32
  }
  func.func @transform_5(%arg0: i32, %arg1: i32) -> (i32, i32) {
    %c0_i32 = arith.constant 0 : i32
    %c0_i32_0 = arith.constant 0 : i32
    return %c0_i32, %arg0 : i32, i32
  }
}

</mosaic_0001>

<llo_original>
// kernel: relu_conv_bn.3
$region0: #{relu_conv_bn.3}
  #allocation0 [shape = 'u32[]', space=smem, size = 0x4, offset = 0x4, fixed_abs, tag = 'smem constant byte address 0x4 - core index']
  #allocation1 [shape = 'u32[144,128]{1,0:T(1,128)}', space=vmem, size = 0x12000, scoped, tag = 'internal scratch']
  %s0 = inlined_call_operand.vmem [shape: bf16[2,256,128], index: 0, kind: input, shape index: {}]
  %s1 = inlined_call_operand.vmem [shape: f32[1,128], index: 1, kind: input, shape index: {}]
  %s2 = inlined_call_operand.vmem [shape: f32[1,128], index: 2, kind: input, shape index: {}]
  %s3 = inlined_call_operand.vmem [shape: f32[1,128], index: 3, kind: input, shape index: {}]
  %s4 = inlined_call_operand.vmem [shape: f32[1,128], index: 4, kind: input, shape index: {}]
  %s5 = inlined_call_operand.vmem [shape: f32[2,256,128], index: 5, kind: output, shape index: {}]
  %s6 = sld [smem:[#allocation0]]
  $region53: #{relu_conv_bn.3} parent=0
    _
  %s8 = ssub.s32 1, %s6
  %s9 = scalar_select 0, %s8, %s6
  loop: start=0, step=1, limit=4
  $region2: #{relu_conv_bn.3} parent=0 // loop_pre_header
    _
  $region3: #{relu_conv_bn.3} parent=0 // loop_header
    %s11 = sphi 0, %s15
    %p12 = scmp.ge.s32.totalorder %s11, 4
    %s18 = sphi 0, %s30
    %s19 = sphi 0, %s26
    %s20 = sphi 0, %s18
    %s21 = sphi 0, %s19
    %s22 = sphi 0, %s20
    %s23 = sphi 0, %s21
    %s35 = sphi 0, %s37
    %s38 = sphi 0, %s35
    %s39 = sphi 0, %s38
    %s55 = sphi 0, %s39
    %s61 = sphi 0, %s63
    %s64 = sphi 0, %s61
    %s65 = sphi 0, %s64
    %s81 = sphi 0, %s65
    %s87 = sphi 0, %s89
    %s90 = sphi 0, %s87
    %s91 = sphi 0, %s90
    %s107 = sphi 0, %s91
    %s113 = sphi 0, %s115
    %s116 = sphi 0, %s113
    %s117 = sphi 0, %s116
    %s133 = sphi 0, %s117
    %s139 = sphi 0, %s141
    %s142 = sphi 0, %s139
    %s143 = sphi 0, %s142
    %s159 = sphi 0, %s143
    %s167 = sphi 0, %s169
    %s170 = sphi 0, %s167
    %s171 = sphi 0, %s170
    %s187 = sphi 0, %s171
  $region4: #{relu_conv_bn.3} parent=0 // loop_header_branch
    %14 = sbr.rel (%p12) target = $region8
  $region5: #{relu_conv_bn.3} parent=0 // loop_body
    %s16 = ssub.s32 %s11, 1
    %s17 = ssub.s32 %s11, 2
    %s24 = sadd.s32 1, %s19
    %p25 = scmp.ge.s32.totalorder %s24, 2
    %s26 = scalar_select %p25, 0, %s24
    %s27 = sadd.s32 1, %s18
    %s28 = scalar_select %p25, %s27, %s18
    %p29 = scmp.ge.s32.totalorder %s28, 1
    %s30 = scalar_select %p29, 0, %s28
    %s31 = ssub.s32 %s19, %s26
    %s32 = ssub.s32 %s18, %s30
    %s33 = sor.u32 %s31, %s32
    %p34 = scmp.eq.s32.totalorder %s33, 0
    %s36 = sadd.s32 %s35, 1
    %s37 = scalar_select %p34, %s35, %s36
    %p40 = pneg %p34
    %p41 = scmp.eq.s32.totalorder %s11, 1
    %p42 = por %p40, %p41
    %p43 = scmp.ne.s32.totalorder %s35, %s38
    %p44 = scmp.eq.s32.totalorder %s11, 0
    %p45 = por %p43, %p44
    %p46 = scmp.ne.s32.totalorder %s35, %s38
    %p47 = scmp.eq.s32.totalorder %s16, 1
    %p48 = por %p46, %p47
    %p49 = scmp.ne.s32.totalorder %s38, %s39
    %p50 = scmp.eq.s32.totalorder %s16, 0
    %p51 = por %p49, %p50
    %p52 = scmp.ne.s32.totalorder %s38, %s39
    %p53 = scmp.eq.s32.totalorder %s17, 1
    %p54 = por %p52, %p53
    %p56 = scmp.ne.s32.totalorder %s39, %s55
    %p57 = scmp.eq.s32.totalorder %s17, 0
    %p58 = por %p56, %p57
    %s59 = ssub.s32 %s18, %s30
    %p60 = scmp.eq.s32.totalorder %s59, 0
    %s62 = sadd.s32 %s61, 1
    %s63 = scalar_select %p60, %s61, %s62
    %p66 = pneg %p60
    %p67 = scmp.eq.s32.totalorder %s11, 1
    %p68 = por %p66, %p67
    %p69 = scmp.ne.s32.totalorder %s61, %s64
    %p70 = scmp.eq.s32.totalorder %s11, 0
    %p71 = por %p69, %p70
    %p72 = scmp.ne.s32.totalorder %s61, %s64
    %p73 = scmp.eq.s32.totalorder %s16, 1
    %p74 = por %p72, %p73
    %p75 = scmp.ne.s32.totalorder %s64, %s65
    %p76 = scmp.eq.s32.totalorder %s16, 0
    %p77 = por %p75, %p76
    %p78 = scmp.ne.s32.totalorder %s64, %s65
    %p79 = scmp.eq.s32.totalorder %s17, 1
    %p80 = por %p78, %p79
    %p82 = scmp.ne.s32.totalorder %s65, %s81
    %p83 = scmp.eq.s32.totalorder %s17, 0
    %p84 = por %p82, %p83
    %s85 = ssub.s32 %s18, %s30
    %p86 = scmp.eq.s32.totalorder %s85, 0
    %s88 = sadd.s32 %s87, 1
    %s89 = scalar_select %p86, %s87, %s88
    %p92 = pneg %p86
    %p93 = scmp.eq.s32.totalorder %s11, 1
    %p94 = por %p92, %p93
    %p95 = scmp.ne.s32.totalorder %s87, %s90
    %p96 = scmp.eq.s32.totalorder %s11, 0
    %p97 = por %p95, %p96
    %p98 = scmp.ne.s32.totalorder %s87, %s90
    %p99 = scmp.eq.s32.totalorder %s16, 1
    %p100 = por %p98, %p99
    %p101 = scmp.ne.s32.totalorder %s90, %s91
    %p102 = scmp.eq.s32.totalorder %s16, 0
    %p103 = por %p101, %p102
    %p104 = scmp.ne.s32.totalorder %s90, %s91
    %p105 = scmp.eq.s32.totalorder %s17, 1
    %p106 = por %p104, %p105
    %p108 = scmp.ne.s32.totalorder %s91, %s107
    %p109 = scmp.eq.s32.totalorder %s17, 0
    %p110 = por %p108, %p109
    %s111 = ssub.s32 %s18, %s30
    %p112 = scmp.eq.s32.totalorder %s111, 0
    %s114 = sadd.s32 %s113, 1
    %s115 = scalar_select %p112, %s113, %s114
    %p118 = pneg %p112
    %p119 = scmp.eq.s32.totalorder %s11, 1
    %p120 = por %p118, %p119
    %p121 = scmp.ne.s32.totalorder %s113, %s116
    %p122 = scmp.eq.s32.totalorder %s11, 0
    %p123 = por %p121, %p122
    %p124 = scmp.ne.s32.totalorder %s113, %s116
    %p125 = scmp.eq.s32.totalorder %s16, 1
    %p126 = por %p124, %p125
    %p127 = scmp.ne.s32.totalorder %s116, %s117
    %p128 = scmp.eq.s32.totalorder %s16, 0
    %p129 = por %p127, %p128
    %p130 = scmp.ne.s32.totalorder %s116, %s117
    %p131 = scmp.eq.s32.totalorder %s17, 1
    %p132 = por %p130, %p131
    %p134 = scmp.ne.s32.totalorder %s117, %s133
    %p135 = scmp.eq.s32.totalorder %s17, 0
    %p136 = por %p134, %p135
    %s137 = ssub.s32 %s18, %s30
    %p138 = scmp.eq.s32.totalorder %s137, 0
    %s140 = sadd.s32 %s139, 1
    %s141 = scalar_select %p138, %s139, %s140
    %p144 = pneg %p138
    %p145 = scmp.eq.s32.totalorder %s11, 1
    %p146 = por %p144, %p145
    %p147 = scmp.ne.s32.totalorder %s139, %s142
    %p148 = scmp.eq.s32.totalorder %s11, 0
    %p149 = por %p147, %p148
    %p150 = scmp.ne.s32.totalorder %s139, %s142
    %p151 = scmp.eq.s32.totalorder %s16, 1
    %p152 = por %p150, %p151
    %p153 = scmp.ne.s32.totalorder %s142, %s143
    %p154 = scmp.eq.s32.totalorder %s16, 0
    %p155 = por %p153, %p154
    %p156 = scmp.ne.s32.totalorder %s142, %s143
    %p157 = scmp.eq.s32.totalorder %s17, 1
    %p158 = por %p156, %p157
    %p160 = scmp.ne.s32.totalorder %s143, %s159
    %p161 = scmp.eq.s32.totalorder %s17, 0
    %p162 = por %p160, %p161
    %s163 = ssub.s32 %s19, %s26
    %s164 = ssub.s32 %s18, %s30
    %s165 = sor.u32 %s163, %s164
    %p166 = scmp.eq.s32.totalorder %s165, 0
    %s168 = sadd.s32 %s167, 1
    %s169 = scalar_select %p166, %s167, %s168
    %p172 = pneg %p166
    %p173 = scmp.eq.s32.totalorder %s11, 1
    %p174 = por %p172, %p173
    %p175 = scmp.ne.s32.totalorder %s167, %s170
    %p176 = scmp.eq.s32.totalorder %s11, 0
    %p177 = por %p175, %p176
    %p178 = scmp.ne.s32.totalorder %s167, %s170
    %p179 = scmp.eq.s32.totalorder %s16, 1
    %p180 = por %p178, %p179
    %p181 = scmp.ne.s32.totalorder %s170, %s171
    %p182 = scmp.eq.s32.totalorder %s16, 0
    %p183 = por %p181, %p182
    %p184 = scmp.ne.s32.totalorder %s170, %s171
    %p185 = scmp.eq.s32.totalorder %s17, 1
    %p186 = por %p184, %p185
    %p188 = scmp.ne.s32.totalorder %s171, %s187
    %p189 = scmp.eq.s32.totalorder %s17, 0
    %p190 = por %p188, %p189
    %p191 = scmp.le.s32.totalorder 1, %s11
    %p192 = scmp.lt.s32.totalorder %s11, 3
    %p193 = pnand %p191, %p192
    %p194 = pneg %p193
    // Predicated region
    $region9: #{relu_conv_bn.3} parent=5 // pred_check
      _
    $region10: #{relu_conv_bn.3} parent=5 // pred_check_branch
      %196 = sbr.rel (%p193) target = $region12
    $region11: #{relu_conv_bn.3} parent=5 // pred_region
      %s197 = ssub.s32 %s11, 1
      // Predicated region
      $region13: #{relu_conv_bn.3} parent=11 // pred_check
        %p198 = pneg %p77
      $region14: #{relu_conv_bn.3} parent=11 // pred_check_branch
        %200 = sbr.rel (%p198) target = $region16
      $region15: #{relu_conv_bn.3} parent=11 // pred_region
        %p201 = scmp.lt.s32.totalorder %s20, 0
        %s202 = scalar_select %p201, %s20, 0
        %s203 = scalar_lea.vmem %s1, %s202
      $region16: #{relu_conv_bn.3} parent=11 // pred_fallthru
        _
      // Predicated region
      $region17: #{relu_conv_bn.3} parent=11 // pred_check
        %p204 = pneg %p103
      $region18: #{relu_conv_bn.3} parent=11 // pred_check_branch
        %206 = sbr.rel (%p204) target = $region20
      $region19: #{relu_conv_bn.3} parent=11 // pred_region
        %p207 = scmp.lt.s32.totalorder %s20, 0
        %s208 = scalar_select %p207, %s20, 0
        %s209 = scalar_lea.vmem %s2, %s208
      $region20: #{relu_conv_bn.3} parent=11 // pred_fallthru
        _
      // Predicated region
      $region21: #{relu_conv_bn.3} parent=11 // pred_check
        %p210 = pneg %p129
      $region22: #{relu_conv_bn.3} parent=11 // pred_check_branch
        %212 = sbr.rel (%p210) target = $region24
      $region23: #{relu_conv_bn.3} parent=11 // pred_region
        %p213 = scmp.lt.s32.totalorder %s20, 0
        %s214 = scalar_select %p213, %s20, 0
        %s215 = scalar_lea.vmem %s3, %s214
      $region24: #{relu_conv_bn.3} parent=11 // pred_fallthru
        _
      // Predicated region
      $region25: #{relu_conv_bn.3} parent=11 // pred_check
        %p216 = pneg %p155
      $region26: #{relu_conv_bn.3} parent=11 // pred_check_branch
        %218 = sbr.rel (%p216) target = $region28
      $region27: #{relu_conv_bn.3} parent=11 // pred_region
        %p219 = scmp.lt.s32.totalorder %s20, 0
        %s220 = scalar_select %p219, %s20, 0
        %s221 = scalar_lea.vmem %s4, %s220
      $region28: #{relu_conv_bn.3} parent=11 // pred_fallthru
        _
    $region12: #{relu_conv_bn.3} parent=5 // pred_fallthru
      _
    %p222 = scmp.lt.s32.totalorder %s11, 2
    // Predicated region
    $region29: #{relu_conv_bn.3} parent=5 // pred_check
      %p223 = pneg %p222
    $region30: #{relu_conv_bn.3} parent=5 // pred_check_branch
      %225 = sbr.rel (%p223) target = $region32
    $region31: #{relu_conv_bn.3} parent=5 // pred_region
      // Predicated region
      $region33: #{relu_conv_bn.3} parent=31 // pred_check
        %p226 = pneg %p45
      $region34: #{relu_conv_bn.3} parent=31 // pred_check_branch
        %228 = sbr.rel (%p226) target = $region36
      $region35: #{relu_conv_bn.3} parent=31 // pred_region
        %p229 = scmp.lt.s32.totalorder %s19, 1
        %s230 = scalar_select %p229, %s19, 1
        %p231 = scmp.lt.s32.totalorder %s18, 0
        %s232 = scalar_select %p231, %s18, 0
        %s233 = smul.addr %s230, 32
        %s234 = sadd.s32 %s232, %s233
        %s235 = smul.addr %s234, 4
        %s236 = scalar_lea.vmem %s0, %s235
      $region36: #{relu_conv_bn.3} parent=31 // pred_fallthru
        _
    $region32: #{relu_conv_bn.3} parent=5 // pred_fallthru
      _
    %p237 = scmp.le.s32.totalorder 1, %s11
    %p238 = scmp.lt.s32.totalorder %s11, 3
    %p239 = pnand %p237, %p238
    %p240 = pneg %p239
    // Predicated region
    $region37: #{relu_conv_bn.3} parent=5 // pred_check
      _
    $region38: #{relu_conv_bn.3} parent=5 // pred_check_branch
      %242 = sbr.rel (%p239) target = $region40
    $region39: #{relu_conv_bn.3} parent=5 // pred_region
      %s243 = ssub.s32 %s11, 1
      %p244 = scmp.lt.s32.totalorder %s21, 1
      %s245 = scalar_select %p244, %s21, 1
      %p246 = scmp.lt.s32.totalorder %s20, 0
      %s247 = scalar_select %p246, %s20, 0
      %s248 = smul.addr %s245, 32
      %s249 = sadd.s32 %s247, %s248
      %s250 = smul.addr %s249, 4
      %s251 = scalar_lea.vmem %s0, %s250
      %p252 = pneg %p51
      %p253 = pneg %p48
      %p254 = scmp.lt.s32.totalorder %s20, 0
      %s255 = scalar_select %p254, %s20, 0
      %s256 = scalar_lea.vmem %s1, %s255
      %p257 = pneg %p77
      %p258 = pneg %p74
      %p259 = scmp.lt.s32.totalorder %s20, 0
      %s260 = scalar_select %p259, %s20, 0
      %s261 = scalar_lea.vmem %s2, %s260
      %p262 = pneg %p103
      %p263 = pneg %p100
      %p264 = scmp.lt.s32.totalorder %s20, 0
      %s265 = scalar_select %p264, %s20, 0
      %s266 = scalar_lea.vmem %s3, %s265
      %p267 = pneg %p129
      %p268 = pneg %p126
      %p269 = scmp.lt.s32.totalorder %s20, 0
      %s270 = scalar_select %p269, %s20, 0
      %s271 = scalar_lea.vmem %s4, %s270
      %p272 = pneg %p155
      %p273 = pneg %p152
      %p274 = pneg %p183
      %p275 = pneg %p180
      %p276 = scmp.lt.s32.totalorder %s21, 1
      %s277 = scalar_select %p276, %s21, 1
      %p278 = scmp.lt.s32.totalorder %s20, 0
      %s279 = scalar_select %p278, %s20, 0
      %s280 = smul.addr %s277, 32
      %s281 = sadd.s32 %s279, %s280
      %s282 = smul.addr %s281, 8
      %s283 = scalar_lea.vmem %s5, %s282
      %p284 = scmp.lt.s32.totalorder %s21, 1
      %s285 = scalar_select %p284, %s21, 1
      %p286 = scmp.lt.s32.totalorder %s20, 0
      %s287 = scalar_select %p286, %s20, 0
      %s288 = smul.addr %s285, 32
      %s289 = sadd.s32 %s287, %s288
      %s290 = smul.addr %s289, 4
      %s291 = scalar_lea.vmem %s0, %s290
      %p292 = scmp.lt.s32.totalorder %s20, 0
      %s293 = scalar_select %p292, %s20, 0
      %s294 = scalar_lea.vmem %s1, %s293
      %p295 = scmp.lt.s32.totalorder %s20, 0
      %s296 = scalar_select %p295, %s20, 0
      %s297 = scalar_lea.vmem %s2, %s296
      %p298 = scmp.lt.s32.totalorder %s20, 0
      %s299 = scalar_select %p298, %s20, 0
      %s300 = scalar_lea.vmem %s3, %s299
      %p301 = scmp.lt.s32.totalorder %s20, 0
      %s302 = scalar_select %p301, %s20, 0
      %s303 = scalar_lea.vmem %s4, %s302
      %p304 = scmp.lt.s32.totalorder %s21, 1
      %s305 = scalar_select %p304, %s21, 1
      %p306 = scmp.lt.s32.totalorder %s20, 0
      %s307 = scalar_select %p306, %s20, 0
      %s308 = smul.addr %s305, 32
      %s309 = sadd.s32 %s307, %s308
      %s310 = smul.addr %s309, 8
      %s311 = scalar_lea.vmem %s5, %s310
      %v312 = vld [vmem:[%s294] sm:$0x1]
      %v313 = vmul.f32 %v312, 0.001953125
      %v314 = vld [vmem:[%s297] sm:$0x1]
      %v315 = vmul.f32 %v314, 0.001953125
      %v316 = vmul.f32 %v313, %v313
      %v317 = vsub.f32 %v315, %v316
      %v318 = vmax.f32 %v317, 0.0
      %v319 = vld [vmem:[%s300] sm:$0x1]
      %v320 = vadd.f32 %v318, 1e-05
      %v321 = vrsqrt.pop %v320
      %v322 = vmul.f32 %v319, %v321
      %v323 = vld [vmem:[%s303] sm:$0x1]
      %v324 = vmul.f32 %v313, %v322
      %v325 = vsub.f32 %v323, %v324
      %v326 = vld [vmem:[%s291] sm:$0xf]
      %v327 = vld [vmem:[%s291 + $0x4] sm:$0xf]
      %v328 = vld [vmem:[%s291 + $0x8] sm:$0xf]
      %v329 = vld [vmem:[%s291 + $0xc] sm:$0xf]
      %v330 = vld [vmem:[%s291 + $0x10] sm:$0xf]
      %v331 = vld [vmem:[%s291 + $0x14] sm:$0xf]
      %v332 = vld [vmem:[%s291 + $0x18] sm:$0xf]
      %v333 = vld [vmem:[%s291 + $0x1c] sm:$0xf]
      %v334 = vld [vmem:[%s291 + $0x20] sm:$0xf]
      %v335 = vld [vmem:[%s291 + $0x24] sm:$0xf]
      %v336 = vld [vmem:[%s291 + $0x28] sm:$0xf]
      %v337 = vld [vmem:[%s291 + $0x2c] sm:$0xf]
      %v338 = vld [vmem:[%s291 + $0x30] sm:$0xf]
      %v339 = vld [vmem:[%s291 + $0x34] sm:$0xf]
      %v340 = vld [vmem:[%s291 + $0x38] sm:$0xf]
      %v341 = vld [vmem:[%s291 + $0x3c] sm:$0xf]
      %v342 = vld [vmem:[%s291 + $0x40] sm:$0xf]
      %v343 = vld [vmem:[%s291 + $0x44] sm:$0xf]
      %v344 = vld [vmem:[%s291 + $0x48] sm:$0xf]
      %v345 = vld [vmem:[%s291 + $0x4c] sm:$0xf]
      %v346 = vld [vmem:[%s291 + $0x50] sm:$0xf]
      %v347 = vld [vmem:[%s291 + $0x54] sm:$0xf]
      %v348 = vld [vmem:[%s291 + $0x58] sm:$0xf]
      %v349 = vld [vmem:[%s291 + $0x5c] sm:$0xf]
      %v350 = vld [vmem:[%s291 + $0x60] sm:$0xf]
      %v351 = vld [vmem:[%s291 + $0x64] sm:$0xf]
      %v352 = vld [vmem:[%s291 + $0x68] sm:$0xf]
      %v353 = vld [vmem:[%s291 + $0x6c] sm:$0xf]
      %v354 = vld [vmem:[%s291 + $0x70] sm:$0xf]
      %v355 = vld [vmem:[%s291 + $0x74] sm:$0xf]
      %v356 = vld [vmem:[%s291 + $0x78] sm:$0xf]
      %v357 = vld [vmem:[%s291 + $0x7c] sm:$0xf]
      %v358 = vunpack.c.l.bf16 %v326
      %v359 = vunpack.c.l.bf16 %v327
      %v360 = vunpack.c.l.bf16 %v328
      %v361 = vunpack.c.l.bf16 %v329
      %v362 = vunpack.c.l.bf16 %v330
      %v363 = vunpack.c.l.bf16 %v331
      %v364 = vunpack.c.l.bf16 %v332
      %v365 = vunpack.c.l.bf16 %v333
      %v366 = vunpack.c.l.bf16 %v334
      %v367 = vunpack.c.l.bf16 %v335
      %v368 = vunpack.c.l.bf16 %v336
      %v369 = vunpack.c.l.bf16 %v337
      %v370 = vunpack.c.l.bf16 %v338
      %v371 = vunpack.c.l.bf16 %v339
      %v372 = vunpack.c.l.bf16 %v340
      %v373 = vunpack.c.l.bf16 %v341
      %v374 = vunpack.c.l.bf16 %v342
      %v375 = vunpack.c.l.bf16 %v343
      %v376 = vunpack.c.l.bf16 %v344
      %v377 = vunpack.c.l.bf16 %v345
      %v378 = vunpack.c.l.bf16 %v346
      %v379 = vunpack.c.l.bf16 %v347
      %v380 = vunpack.c.l.bf16 %v348
      %v381 = vunpack.c.l.bf16 %v349
      %v382 = vunpack.c.l.bf16 %v350
      %v383 = vunpack.c.l.bf16 %v351
      %v384 = vunpack.c.l.bf16 %v352
      %v385 = vunpack.c.l.bf16 %v353
      %v386 = vunpack.c.l.bf16 %v354
      %v387 = vunpack.c.l.bf16 %v355
      %v388 = vunpack.c.l.bf16 %v356
      %v389 = vunpack.c.l.bf16 %v357
      %v391 = vlaneseq
      %v392 = vshrl.u32 %v391, 7
      %v393 = vsub.s32 0, %v392
      %v394 = vrot.slane %v322, %v393
      %v396 = vmul.f32 %v358, %v394
      %v397 = vmul.f32 %v359, %v394
      %v398 = vmul.f32 %v360, %v394
      %v399 = vmul.f32 %v361, %v394
      %v400 = vmul.f32 %v362, %v394
      %v401 = vmul.f32 %v363, %v394
      %v402 = vmul.f32 %v364, %v394
      %v403 = vmul.f32 %v365, %v394
      %v404 = vmul.f32 %v366, %v394
      %v405 = vmul.f32 %v367, %v394
      %v406 = vmul.f32 %v368, %v394
      %v407 = vmul.f32 %v369, %v394
      %v408 = vmul.f32 %v370, %v394
      %v409 = vmul.f32 %v371, %v394
      %v410 = vmul.f32 %v372, %v394
      %v411 = vmul.f32 %v373, %v394
      %v412 = vmul.f32 %v374, %v394
      %v413 = vmul.f32 %v375, %v394
      %v414 = vmul.f32 %v376, %v394
      %v415 = vmul.f32 %v377, %v394
      %v416 = vmul.f32 %v378, %v394
      %v417 = vmul.f32 %v379, %v394
      %v418 = vmul.f32 %v380, %v394
      %v419 = vmul.f32 %v381, %v394
      %v420 = vmul.f32 %v382, %v394
      %v421 = vmul.f32 %v383, %v394
      %v422 = vmul.f32 %v384, %v394
      %v423 = vmul.f32 %v385, %v394
      %v424 = vmul.f32 %v386, %v394
      %v425 = vmul.f32 %v387, %v394
      %v426 = vmul.f32 %v388, %v394
      %v427 = vmul.f32 %v389, %v394
      %v429 = vlaneseq
      %v430 = vshrl.u32 %v429, 7
      %v431 = vsub.s32 0, %v430
      %v432 = vrot.slane %v325, %v431
      %v434 = vadd.f32 %v396, %v432
      %v435 = vadd.f32 %v397, %v432
      %v436 = vadd.f32 %v398, %v432
      %v437 = vadd.f32 %v399, %v432
      %v438 = vadd.f32 %v400, %v432
      %v439 = vadd.f32 %v401, %v432
      %v440 = vadd.f32 %v402, %v432
      %v441 = vadd.f32 %v403, %v432
      %v442 = vadd.f32 %v404, %v432
      %v443 = vadd.f32 %v405, %v432
      %v444 = vadd.f32 %v406, %v432
      %v445 = vadd.f32 %v407, %v432
      %v446 = vadd.f32 %v408, %v432
      %v447 = vadd.f32 %v409, %v432
      %v448 = vadd.f32 %v410, %v432
      %v449 = vadd.f32 %v411, %v432
      %v450 = vadd.f32 %v412, %v432
      %v451 = vadd.f32 %v413, %v432
      %v452 = vadd.f32 %v414, %v432
      %v453 = vadd.f32 %v415, %v432
      %v454 = vadd.f32 %v416, %v432
      %v455 = vadd.f32 %v417, %v432
      %v456 = vadd.f32 %v418, %v432
      %v457 = vadd.f32 %v419, %v432
      %v458 = vadd.f32 %v420, %v432
      %v459 = vadd.f32 %v421, %v432
      %v460 = vadd.f32 %v422, %v432
      %v461 = vadd.f32 %v423, %v432
      %v462 = vadd.f32 %v424, %v432
      %v463 = vadd.f32 %v425, %v432
      %v464 = vadd.f32 %v426, %v432
      %v465 = vadd.f32 %v427, %v432
      %466 = vst [vmem:[%s311] sm:$0xff] %v434
      %467 = vst [vmem:[%s311 + $0x8] sm:$0xff] %v435
      %468 = vst [vmem:[%s311 + $0x10] sm:$0xff] %v436
      %469 = vst [vmem:[%s311 + $0x18] sm:$0xff] %v437
      %470 = vst [vmem:[%s311 + $0x20] sm:$0xff] %v438
      %471 = vst [vmem:[%s311 + $0x28] sm:$0xff] %v439
      %472 = vst [vmem:[%s311 + $0x30] sm:$0xff] %v440
      %473 = vst [vmem:[%s311 + $0x38] sm:$0xff] %v441
      %474 = vst [vmem:[%s311 + $0x40] sm:$0xff] %v442
      %475 = vst [vmem:[%s311 + $0x48] sm:$0xff] %v443
      %476 = vst [vmem:[%s311 + $0x50] sm:$0xff] %v444
      %477 = vst [vmem:[%s311 + $0x58] sm:$0xff] %v445
      %478 = vst [vmem:[%s311 + $0x60] sm:$0xff] %v446
      %479 = vst [vmem:[%s311 + $0x68] sm:$0xff] %v447
      %480 = vst [vmem:[%s311 + $0x70] sm:$0xff] %v448
      %481 = vst [vmem:[%s311 + $0x78] sm:$0xff] %v449
      %482 = vst [vmem:[%s311 + $0x80] sm:$0xff] %v450
      %483 = vst [vmem:[%s311 + $0x88] sm:$0xff] %v451
      %484 = vst [vmem:[%s311 + $0x90] sm:$0xff] %v452
      %485 = vst [vmem:[%s311 + $0x98] sm:$0xff] %v453
      %486 = vst [vmem:[%s311 + $0xa0] sm:$0xff] %v454
      %487 = vst [vmem:[%s311 + $0xa8] sm:$0xff] %v455
      %488 = vst [vmem:[%s311 + $0xb0] sm:$0xff] %v456
      %489 = vst [vmem:[%s311 + $0xb8] sm:$0xff] %v457
      %490 = vst [vmem:[%s311 + $0xc0] sm:$0xff] %v458
      %491 = vst [vmem:[%s311 + $0xc8] sm:$0xff] %v459
      %492 = vst [vmem:[%s311 + $0xd0] sm:$0xff] %v460
      %493 = vst [vmem:[%s311 + $0xd8] sm:$0xff] %v461
      %494 = vst [vmem:[%s311 + $0xe0] sm:$0xff] %v462
      %495 = vst [vmem:[%s311 + $0xe8] sm:$0xff] %v463
      %496 = vst [vmem:[%s311 + $0xf0] sm:$0xff] %v464
      %497 = vst [vmem:[%s311 + $0xf8] sm:$0xff] %v465
      %p498 = scmp.lt.s32.totalorder %s21, 1
      %s499 = scalar_select %p498, %s21, 1
      %p500 = scmp.lt.s32.totalorder %s20, 0
      %s501 = scalar_select %p500, %s20, 0
      %s502 = smul.addr %s499, 32
      %s503 = sadd.s32 %s501, %s502
      %s504 = smul.addr %s503, 8
      %s505 = scalar_lea.vmem %s5, %s504
      // Predicated region
      $region41: #{relu_conv_bn.3} parent=39 // pred_check
        %p506 = pneg %p180
      $region42: #{relu_conv_bn.3} parent=39 // pred_check_branch
        %508 = sbr.rel (%p506) target = $region44
      $region43: #{relu_conv_bn.3} parent=39 // pred_region
        _
      $region44: #{relu_conv_bn.3} parent=39 // pred_fallthru
        _
    $region40: #{relu_conv_bn.3} parent=5 // pred_fallthru
      _
    %p509 = scmp.le.s32.totalorder 2, %s11
    // Predicated region
    $region45: #{relu_conv_bn.3} parent=5 // pred_check
      %p510 = pneg %p509
    $region46: #{relu_conv_bn.3} parent=5 // pred_check_branch
      %512 = sbr.rel (%p510) target = $region48
    $region47: #{relu_conv_bn.3} parent=5 // pred_region
      %s513 = ssub.s32 %s11, 2
      // Predicated region
      $region49: #{relu_conv_bn.3} parent=47 // pred_check
        %p514 = pneg %p186
      $region50: #{relu_conv_bn.3} parent=47 // pred_check_branch
        %516 = sbr.rel (%p514) target = $region52
      $region51: #{relu_conv_bn.3} parent=47 // pred_region
        %p517 = scmp.lt.s32.totalorder %s23, 1
        %s518 = scalar_select %p517, %s23, 1
        %p519 = scmp.lt.s32.totalorder %s22, 0
        %s520 = scalar_select %p519, %s22, 0
        %s521 = smul.addr %s518, 32
        %s522 = sadd.s32 %s520, %s521
        %s523 = smul.addr %s522, 8
        %s524 = scalar_lea.vmem %s5, %s523
      $region52: #{relu_conv_bn.3} parent=47 // pred_fallthru
        _
    $region48: #{relu_conv_bn.3} parent=5 // pred_fallthru
      _
  $region6: #{relu_conv_bn.3} parent=0 // loop_footer
    %s15 = sadd.s32 1, %s11
  $region7: #{relu_conv_bn.3} parent=0 // loop_footer_branch
    %10 = sbr.rel target = $region3
  $region8: #{relu_conv_bn.3} parent=0 // loop_exit
    _

// kernel: relu_conv_bn.2
$region0: #{relu_conv_bn.2}
  #allocation0 [shape = 'u32[]', space=smem, size = 0x4, offset = 0x4, fixed_abs, tag = 'smem constant byte address 0x4 - core index']
  #allocation1 [shape = 'u32[144,128]{1,0:T(1,128)}', space=vmem, size = 0x12000, scoped, tag = 'internal scratch']
  %s0 = inlined_call_operand.vmem [shape: bf16[2,272,4], index: 0, kind: input, shape index: {}]
  %s1 = inlined_call_operand.vmem [shape: bf16[1,4,128], index: 1, kind: input, shape index: {}]
  %s2 = inlined_call_operand.vmem [shape: f32[256,1], index: 2, kind: input, shape index: {}]
  %s3 = inlined_call_operand.vmem [shape: bf16[2,256,128], index: 3, kind: output, shape index: {0}]
  %s4 = inlined_call_operand.vmem [shape: f32[1,128], index: 4, kind: output, shape index: {1}]
  %s5 = inlined_call_operand.vmem [shape: f32[1,128], index: 5, kind: output, shape index: {2}]
  %6 = xla_tuple %s3, %s4, %s5
  %s7 = sld [smem:[#allocation0]]
  $region65: #{relu_conv_bn.2} parent=0
    _
  %s9 = ssub.s32 1, %s7
  %s10 = scalar_select 0, %s9, %s7
  loop: start=0, step=1, limit=4
  $region2: #{relu_conv_bn.2} parent=0 // loop_pre_header
    _
  $region3: #{relu_conv_bn.2} parent=0 // loop_header
    %s12 = sphi 0, %s16
    %p13 = scmp.ge.s32.totalorder %s12, 4
    %s19 = sphi 0, %s31
    %s20 = sphi 0, %s27
    %s21 = sphi 0, %s19
    %s22 = sphi 0, %s20
    %s23 = sphi 0, %s21
    %s24 = sphi 0, %s22
    %s34 = sphi 0, %s36
    %s37 = sphi 0, %s34
    %s38 = sphi 0, %s37
    %s54 = sphi 0, %s38
    %s60 = sphi 0, %s62
    %s63 = sphi 0, %s60
    %s64 = sphi 0, %s63
    %s80 = sphi 0, %s64
    %s84 = sphi 0, %s84
    %s86 = sphi 0, %s84
    %s87 = sphi 0, %s86
    %s101 = sphi 0, %s87
    %s109 = sphi 0, %s111
    %s112 = sphi 0, %s109
    %s113 = sphi 0, %s112
    %s129 = sphi 0, %s113
    %s135 = sphi 0, %s137
    %s138 = sphi 0, %s135
    %s139 = sphi 0, %s138
    %s155 = sphi 0, %s139
    %s161 = sphi 0, %s163
    %s164 = sphi 0, %s161
    %s165 = sphi 0, %s164
    %s181 = sphi 0, %s165
  $region4: #{relu_conv_bn.2} parent=0 // loop_header_branch
    %15 = sbr.rel (%p13) target = $region8
  $region5: #{relu_conv_bn.2} parent=0 // loop_body
    %s17 = ssub.s32 %s12, 1
    %s18 = ssub.s32 %s12, 2
    %s25 = sadd.s32 1, %s20
    %p26 = scmp.ge.s32.totalorder %s25, 2
    %s27 = scalar_select %p26, 0, %s25
    %s28 = sadd.s32 1, %s19
    %s29 = scalar_select %p26, %s28, %s19
    %p30 = scmp.ge.s32.totalorder %s29, 1
    %s31 = scalar_select %p30, 0, %s29
    %s32 = ssub.s32 %s20, %s27
    %p33 = scmp.eq.s32.totalorder %s32, 0
    %s35 = sadd.s32 %s34, 1
    %s36 = scalar_select %p33, %s34, %s35
    %p39 = pneg %p33
    %p40 = scmp.eq.s32.totalorder %s12, 1
    %p41 = por %p39, %p40
    %p42 = scmp.ne.s32.totalorder %s34, %s37
    %p43 = scmp.eq.s32.totalorder %s12, 0
    %p44 = por %p42, %p43
    %p45 = scmp.ne.s32.totalorder %s34, %s37
    %p46 = scmp.eq.s32.totalorder %s17, 1
    %p47 = por %p45, %p46
    %p48 = scmp.ne.s32.totalorder %s37, %s38
    %p49 = scmp.eq.s32.totalorder %s17, 0
    %p50 = por %p48, %p49
    %p51 = scmp.ne.s32.totalorder %s37, %s38
    %p52 = scmp.eq.s32.totalorder %s18, 1
    %p53 = por %p51, %p52
    %p55 = scmp.ne.s32.totalorder %s38, %s54
    %p56 = scmp.eq.s32.totalorder %s18, 0
    %p57 = por %p55, %p56
    %s58 = ssub.s32 %s19, %s31
    %p59 = scmp.eq.s32.totalorder %s58, 0
    %s61 = sadd.s32 %s60, 1
    %s62 = scalar_select %p59, %s60, %s61
    %p65 = pneg %p59
    %p66 = scmp.eq.s32.totalorder %s12, 1
    %p67 = por %p65, %p66
    %p68 = scmp.ne.s32.totalorder %s60, %s63
    %p69 = scmp.eq.s32.totalorder %s12, 0
    %p70 = por %p68, %p69
    %p71 = scmp.ne.s32.totalorder %s60, %s63
    %p72 = scmp.eq.s32.totalorder %s17, 1
    %p73 = por %p71, %p72
    %p74 = scmp.ne.s32.totalorder %s63, %s64
    %p75 = scmp.eq.s32.totalorder %s17, 0
    %p76 = por %p74, %p75
    %p77 = scmp.ne.s32.totalorder %s63, %s64
    %p78 = scmp.eq.s32.totalorder %s18, 1
    %p79 = por %p77, %p78
    %p81 = scmp.ne.s32.totalorder %s64, %s80
    %p82 = scmp.eq.s32.totalorder %s18, 0
    %p83 = por %p81, %p82
    %s85 = sadd.s32 %s84, 1
    %p88 = scmp.eq.s32.totalorder %s12, 1
    %p89 = scmp.ne.s32.totalorder %s84, %s86
    %p90 = scmp.eq.s32.totalorder %s12, 0
    %p91 = por %p89, %p90
    %p92 = scmp.ne.s32.totalorder %s84, %s86
    %p93 = scmp.eq.s32.totalorder %s17, 1
    %p94 = por %p92, %p93
    %p95 = scmp.ne.s32.totalorder %s86, %s87
    %p96 = scmp.eq.s32.totalorder %s17, 0
    %p97 = por %p95, %p96
    %p98 = scmp.ne.s32.totalorder %s86, %s87
    %p99 = scmp.eq.s32.totalorder %s18, 1
    %p100 = por %p98, %p99
    %p102 = scmp.ne.s32.totalorder %s87, %s101
    %p103 = scmp.eq.s32.totalorder %s18, 0
    %p104 = por %p102, %p103
    %s105 = ssub.s32 %s20, %s27
    %s106 = ssub.s32 %s19, %s31
    %s107 = sor.u32 %s105, %s106
    %p108 = scmp.eq.s32.totalorder %s107, 0
    %s110 = sadd.s32 %s109, 1
    %s111 = scalar_select %p108, %s109, %s110
    %p114 = pneg %p108
    %p115 = scmp.eq.s32.totalorder %s12, 1
    %p116 = por %p114, %p115
    %p117 = scmp.ne.s32.totalorder %s109, %s112
    %p118 = scmp.eq.s32.totalorder %s12, 0
    %p119 = por %p117, %p118
    %p120 = scmp.ne.s32.totalorder %s109, %s112
    %p121 = scmp.eq.s32.totalorder %s17, 1
    %p122 = por %p120, %p121
    %p123 = scmp.ne.s32.totalorder %s112, %s113
    %p124 = scmp.eq.s32.totalorder %s17, 0
    %p125 = por %p123, %p124
    %p126 = scmp.ne.s32.totalorder %s112, %s113
    %p127 = scmp.eq.s32.totalorder %s18, 1
    %p128 = por %p126, %p127
    %p130 = scmp.ne.s32.totalorder %s113, %s129
    %p131 = scmp.eq.s32.totalorder %s18, 0
    %p132 = por %p130, %p131
    %s133 = ssub.s32 %s19, %s31
    %p134 = scmp.eq.s32.totalorder %s133, 0
    %s136 = sadd.s32 %s135, 1
    %s137 = scalar_select %p134, %s135, %s136
    %p140 = pneg %p134
    %p141 = scmp.eq.s32.totalorder %s12, 1
    %p142 = por %p140, %p141
    %p143 = scmp.ne.s32.totalorder %s135, %s138
    %p144 = scmp.eq.s32.totalorder %s12, 0
    %p145 = por %p143, %p144
    %p146 = scmp.ne.s32.totalorder %s135, %s138
    %p147 = scmp.eq.s32.totalorder %s17, 1
    %p148 = por %p146, %p147
    %p149 = scmp.ne.s32.totalorder %s138, %s139
    %p150 = scmp.eq.s32.totalorder %s17, 0
    %p151 = por %p149, %p150
    %p152 = scmp.ne.s32.totalorder %s138, %s139
    %p153 = scmp.eq.s32.totalorder %s18, 1
    %p154 = por %p152, %p153
    %p156 = scmp.ne.s32.totalorder %s139, %s155
    %p157 = scmp.eq.s32.totalorder %s18, 0
    %p158 = por %p156, %p157
    %s159 = ssub.s32 %s19, %s31
    %p160 = scmp.eq.s32.totalorder %s159, 0
    %s162 = sadd.s32 %s161, 1
    %s163 = scalar_select %p160, %s161, %s162
    %p166 = pneg %p160
    %p167 = scmp.eq.s32.totalorder %s12, 1
    %p168 = por %p166, %p167
    %p169 = scmp.ne.s32.totalorder %s161, %s164
    %p170 = scmp.eq.s32.totalorder %s12, 0
    %p171 = por %p169, %p170
    %p172 = scmp.ne.s32.totalorder %s161, %s164
    %p173 = scmp.eq.s32.totalorder %s17, 1
    %p174 = por %p172, %p173
    %p175 = scmp.ne.s32.totalorder %s164, %s165
    %p176 = scmp.eq.s32.totalorder %s17, 0
    %p177 = por %p175, %p176
    %p178 = scmp.ne.s32.totalorder %s164, %s165
    %p179 = scmp.eq.s32.totalorder %s18, 1
    %p180 = por %p178, %p179
    %p182 = scmp.ne.s32.totalorder %s165, %s181
    %p183 = scmp.eq.s32.totalorder %s18, 0
    %p184 = por %p182, %p183
    %p185 = scmp.le.s32.totalorder 1, %s12
    %p186 = scmp.lt.s32.totalorder %s12, 3
    %p187 = pnand %p185, %p186
    %p188 = pneg %p187
    // Predicated region
    $region9: #{relu_conv_bn.2} parent=5 // pred_check
      _
    $region10: #{relu_conv_bn.2} parent=5 // pred_check_branch
      %190 = sbr.rel (%p187) target = $region12
    $region11: #{relu_conv_bn.2} parent=5 // pred_region
      %s191 = ssub.s32 %s12, 1
      // Predicated region
      $region13: #{relu_conv_bn.2} parent=11 // pred_check
        %p192 = pneg %p76
      $region14: #{relu_conv_bn.2} parent=11 // pred_check_branch
        %194 = sbr.rel (%p192) target = $region16
      $region15: #{relu_conv_bn.2} parent=11 // pred_region
        %p195 = scmp.lt.s32.totalorder %s21, 0
        %s196 = scalar_select %p195, %s21, 0
        %s197 = smul.addr %s196, 2
        %s198 = scalar_lea.vmem %s1, %s197
      $region16: #{relu_conv_bn.2} parent=11 // pred_fallthru
        _
      // Predicated region
      $region17: #{relu_conv_bn.2} parent=11 // pred_check
        %p199 = pneg %p97
      $region18: #{relu_conv_bn.2} parent=11 // pred_check_branch
        %201 = sbr.rel (%p199) target = $region20
      $region19: #{relu_conv_bn.2} parent=11 // pred_region
        _
      $region20: #{relu_conv_bn.2} parent=11 // pred_fallthru
        _
    $region12: #{relu_conv_bn.2} parent=5 // pred_fallthru
      _
    %p202 = scmp.lt.s32.totalorder %s12, 2
    // Predicated region
    $region21: #{relu_conv_bn.2} parent=5 // pred_check
      %p203 = pneg %p202
    $region22: #{relu_conv_bn.2} parent=5 // pred_check_branch
      %205 = sbr.rel (%p203) target = $region24
    $region23: #{relu_conv_bn.2} parent=5 // pred_region
      // Predicated region
      $region25: #{relu_conv_bn.2} parent=23 // pred_check
        %p206 = pneg %p44
      $region26: #{relu_conv_bn.2} parent=23 // pred_check_branch
        %208 = sbr.rel (%p206) target = $region28
      $region27: #{relu_conv_bn.2} parent=23 // pred_region
        %p209 = scmp.lt.s32.totalorder %s20, 1
        %s210 = scalar_select %p209, %s20, 1
        %s211 = smul.addr %s210, 34
        %s212 = smul.addr %s211, 4
        %s213 = scalar_lea.vmem %s0, %s212
      $region28: #{relu_conv_bn.2} parent=23 // pred_fallthru
        _
    $region24: #{relu_conv_bn.2} parent=5 // pred_fallthru
      _
    %p214 = scmp.le.s32.totalorder 1, %s12
    %p215 = scmp.lt.s32.totalorder %s12, 3
    %p216 = pnand %p214, %p215
    %p217 = pneg %p216
    // Predicated region
    $region29: #{relu_conv_bn.2} parent=5 // pred_check
      _
    $region30: #{relu_conv_bn.2} parent=5 // pred_check_branch
      %219 = sbr.rel (%p216) target = $region32
    $region31: #{relu_conv_bn.2} parent=5 // pred_region
      %s220 = ssub.s32 %s12, 1
      %p221 = scmp.lt.s32.totalorder %s22, 1
      %s222 = scalar_select %p221, %s22, 1
      %s223 = smul.addr %s222, 34
      %s224 = smul.addr %s223, 4
      %s225 = scalar_lea.vmem %s0, %s224
      %p226 = pneg %p50
      %p227 = pneg %p47
      %p228 = scmp.lt.s32.totalorder %s21, 0
      %s229 = scalar_select %p228, %s21, 0
      %s230 = smul.addr %s229, 2
      %s231 = scalar_lea.vmem %s1, %s230
      %p232 = pneg %p76
      %p233 = pneg %p73
      %p234 = pneg %p97
      %p235 = pneg %p94
      %p236 = pneg %p125
      %p237 = pneg %p122
      %p238 = scmp.lt.s32.totalorder %s22, 1
      %s239 = scalar_select %p238, %s22, 1
      %p240 = scmp.lt.s32.totalorder %s21, 0
      %s241 = scalar_select %p240, %s21, 0
      %s242 = smul.addr %s239, 32
      %s243 = sadd.s32 %s241, %s242
      %s244 = smul.addr %s243, 4
      %s245 = scalar_lea.vmem %s3, %s244
      %p246 = pneg %p151
      %p247 = pneg %p148
      %p248 = scmp.lt.s32.totalorder %s21, 0
      %s249 = scalar_select %p248, %s21, 0
      %s250 = scalar_lea.vmem %s4, %s249
      %p251 = pneg %p177
      %p252 = pneg %p174
      %p253 = scmp.lt.s32.totalorder %s21, 0
      %s254 = scalar_select %p253, %s21, 0
      %s255 = scalar_lea.vmem %s5, %s254
      %p256 = scmp.lt.s32.totalorder %s22, 1
      %s257 = scalar_select %p256, %s22, 1
      %s258 = smul.addr %s257, 34
      %s259 = smul.addr %s258, 4
      %s260 = scalar_lea.vmem %s0, %s259
      %p261 = scmp.lt.s32.totalorder %s21, 0
      %s262 = scalar_select %p261, %s21, 0
      %s263 = smul.addr %s262, 2
      %s264 = scalar_lea.vmem %s1, %s263
      %p265 = scmp.lt.s32.totalorder %s22, 1
      %s266 = scalar_select %p265, %s22, 1
      %p267 = scmp.lt.s32.totalorder %s21, 0
      %s268 = scalar_select %p267, %s21, 0
      %s269 = smul.addr %s266, 32
      %s270 = sadd.s32 %s268, %s269
      %s271 = smul.addr %s270, 4
      %s272 = scalar_lea.vmem %s3, %s271
      %p273 = scmp.lt.s32.totalorder %s21, 0
      %s274 = scalar_select %p273, %s21, 0
      %s275 = scalar_lea.vmem %s4, %s274
      %p276 = scmp.lt.s32.totalorder %s21, 0
      %s277 = scalar_select %p276, %s21, 0
      %s278 = scalar_lea.vmem %s5, %s277
      %p280 = scmp.eq.s32.totalorder %s22, 0
      // Predicated region
      $region33: #{relu_conv_bn.2} parent=31 // pred_check
        %p281 = pneg %p280
      $region34: #{relu_conv_bn.2} parent=31 // pred_check_branch
        %283 = sbr.rel (%p281) target = $region36
      $region35: #{relu_conv_bn.2} parent=31 // pred_region
        %284 = vst [vmem:[%s275] sm:$0x1] 0.0
        %285 = vst [vmem:[%s278] sm:$0x1] 0.0
      $region36: #{relu_conv_bn.2} parent=31 // pred_fallthru
        _
      %v286 = vld [vmem:[%s260] sm:$0xf]
      %v287 = vld [vmem:[%s260 + $0x4] sm:$0xf]
      %v288 = vld [vmem:[%s260 + $0x8] sm:$0xf]
      %v289 = vld [vmem:[%s260 + $0xc] sm:$0xf]
      %v290 = vld [vmem:[%s260 + $0x10] sm:$0xf]
      %v291 = vld [vmem:[%s260 + $0x14] sm:$0xf]
      %v292 = vld [vmem:[%s260 + $0x18] sm:$0xf]
      %v293 = vld [vmem:[%s260 + $0x1c] sm:$0xf]
      %v294 = vld [vmem:[%s260 + $0x20] sm:$0xf]
      %v295 = vld [vmem:[%s260 + $0x24] sm:$0xf]
      %v296 = vld [vmem:[%s260 + $0x28] sm:$0xf]
      %v297 = vld [vmem:[%s260 + $0x2c] sm:$0xf]
      %v298 = vld [vmem:[%s260 + $0x30] sm:$0xf]
      %v299 = vld [vmem:[%s260 + $0x34] sm:$0xf]
      %v300 = vld [vmem:[%s260 + $0x38] sm:$0xf]
      %v301 = vld [vmem:[%s260 + $0x3c] sm:$0xf]
      %v302 = vld [vmem:[%s260 + $0x40] sm:$0xf]
      %v303 = vld [vmem:[%s260 + $0x44] sm:$0xf]
      %v304 = vld [vmem:[%s260 + $0x48] sm:$0xf]
      %v305 = vld [vmem:[%s260 + $0x4c] sm:$0xf]
      %v306 = vld [vmem:[%s260 + $0x50] sm:$0xf]
      %v307 = vld [vmem:[%s260 + $0x54] sm:$0xf]
      %v308 = vld [vmem:[%s260 + $0x58] sm:$0xf]
      %v309 = vld [vmem:[%s260 + $0x5c] sm:$0xf]
      %v310 = vld [vmem:[%s260 + $0x60] sm:$0xf]
      %v311 = vld [vmem:[%s260 + $0x64] sm:$0xf]
      %v312 = vld [vmem:[%s260 + $0x68] sm:$0xf]
      %v313 = vld [vmem:[%s260 + $0x6c] sm:$0xf]
      %v314 = vld [vmem:[%s260 + $0x70] sm:$0xf]
      %v315 = vld [vmem:[%s260 + $0x74] sm:$0xf]
      %v316 = vld [vmem:[%s260 + $0x78] sm:$0xf]
      %v317 = vld [vmem:[%s260 + $0x7c] sm:$0xf]
      %v318 = vld [vmem:[%s264] sm:$0x3]
      %v351 = vunpack.c.l.b16 %v286
      %v352 = vunpack.c.l.b16 %v287
      %v353 = vunpack.c.l.b16 %v288
      %v354 = vunpack.c.l.b16 %v289
      %v355 = vunpack.c.l.b16 %v290
      %v356 = vunpack.c.l.b16 %v291
      %v357 = vunpack.c.l.b16 %v292
      %v358 = vunpack.c.l.b16 %v293
      %v359 = vunpack.c.l.b16 %v294
      %v360 = vunpack.c.l.b16 %v295
      %v361 = vunpack.c.l.b16 %v296
      %v362 = vunpack.c.l.b16 %v297
      %v363 = vunpack.c.l.b16 %v298
      %v364 = vunpack.c.l.b16 %v299
      %v365 = vunpack.c.l.b16 %v300
      %v366 = vunpack.c.l.b16 %v301
      %v367 = vunpack.c.l.b16 %v302
      %v368 = vunpack.c.l.b16 %v303
      %v369 = vunpack.c.l.b16 %v304
      %v370 = vunpack.c.l.b16 %v305
      %v371 = vunpack.c.l.b16 %v306
      %v372 = vunpack.c.l.b16 %v307
      %v373 = vunpack.c.l.b16 %v308
      %v374 = vunpack.c.l.b16 %v309
      %v375 = vunpack.c.l.b16 %v310
      %v376 = vunpack.c.l.b16 %v311
      %v377 = vunpack.c.l.b16 %v312
      %v378 = vunpack.c.l.b16 %v313
      %v379 = vunpack.c.l.b16 %v314
      %v380 = vunpack.c.l.b16 %v315
      %v381 = vunpack.c.l.b16 %v316
      %v382 = vunpack.c.l.b16 %v317
      %v383 = vpack.c.b16 %v352, %v351
      %v384 = vpack.c.b16 %v354, %v353
      %v385 = vpack.c.b16 %v356, %v355
      %v386 = vpack.c.b16 %v358, %v357
      %v387 = vpack.c.b16 %v360, %v359
      %v388 = vpack.c.b16 %v362, %v361
      %v389 = vpack.c.b16 %v364, %v363
      %v390 = vpack.c.b16 %v366, %v365
      %v391 = vpack.c.b16 %v368, %v367
      %v392 = vpack.c.b16 %v370, %v369
      %v393 = vpack.c.b16 %v372, %v371
      %v394 = vpack.c.b16 %v374, %v373
      %v395 = vpack.c.b16 %v376, %v375
      %v396 = vpack.c.b16 %v378, %v377
      %v397 = vpack.c.b16 %v380, %v379
      %v398 = vpack.c.b16 %v382, %v381
      %vm399 = vcmask 31744
      %v401 = vsel %vm399, %v383, 0
      %v404 = vsel %vm399, %v384, 0
      %v407 = vsel %vm399, %v385, 0
      %v410 = vsel %vm399, %v386, 0
      %v413 = vsel %vm399, %v387, 0
      %v416 = vsel %vm399, %v388, 0
      %v419 = vsel %vm399, %v389, 0
      %v422 = vsel %vm399, %v390, 0
      %v425 = vsel %vm399, %v391, 0
      %v428 = vsel %vm399, %v392, 0
      %v431 = vsel %vm399, %v393, 0
      %v434 = vsel %vm399, %v394, 0
      %v437 = vsel %vm399, %v395, 0
      %v440 = vsel %vm399, %v396, 0
      %v443 = vsel %vm399, %v397, 0
      %v446 = vsel %vm399, %v398, 0
      %vm448 = vcmask 1041408
      %v450 = vsel %vm448, %v318, 0
      %452 = vmatprep.subr.bf16.mxu0 0
      %453 = vmatpush1.bf16.msra.mxu0 %v450
      %454 = vmatprep.subr.bf16.mxu0 0
      %455 = vmatpush1.bf16.msra.mxu0 0
      %456 = vmatprep.subr.bf16.mxu0 0
      %457 = vmatpush1.bf16.msra.mxu0 0
      %458 = vmatprep.subr.bf16.mxu0 0
      %459 = vmatpush1.bf16.msra.mxu0 0
      %460 = vmatprep.subr.bf16.mxu0 0
      %461 = vmatpush1.bf16.msra.mxu0 0
      %462 = vmatprep.subr.bf16.mxu0 0
      %463 = vmatpush1.bf16.msra.mxu0 0
      %464 = vmatprep.subr.bf16.mxu0 0
      %465 = vmatpush1.bf16.msra.mxu0 0
      %466 = vmatprep.subr.bf16.mxu0 0
      %467 = vmatpush1.bf16.msra.mxu0 0
      %468 = vmatprep.subr.bf16.mxu0 0
      %469 = vmatpush1.bf16.msra.mxu0 0
      %470 = vmatprep.subr.bf16.mxu0 0
      %471 = vmatpush1.bf16.msra.mxu0 0
      %472 = vmatprep.subr.bf16.mxu0 0
      %473 = vmatpush1.bf16.msra.mxu0 0
      %474 = vmatprep.subr.bf16.mxu0 0
      %475 = vmatpush1.bf16.msra.mxu0 0
      %476 = vmatprep.subr.bf16.mxu0 0
      %477 = vmatpush1.bf16.msra.mxu0 0
      %478 = vmatprep.subr.bf16.mxu0 0
      %479 = vmatpush1.bf16.msra.mxu0 0
      %480 = vmatprep.subr.bf16.mxu0 0
      %481 = vmatpush1.bf16.msra.mxu0 0
      %482 = vmatprep.subr.bf16.mxu0 0
      %483 = vmatpush1.bf16.msra.mxu0 0
      %484 = vmatprep.mubr.bf16.mxu0 0
      %485 = vmatmul.mubr.bf16.gmra.mrb[0].mxu0 %v401
      %v486 = vpop.f32.mrb[0].mxu0
      %v487 = vadd.f32 0.0, %v486
      %v488 = vpop.f32.mrb[0].mxu0
      %v489 = vpop.f32.mrb[0].mxu0
      %v490 = vadd.f32 0.0, %v489
      %v491 = vpop.f32.mrb[0].mxu0
      %492 = vmatprep.mubr.bf16.mxu0 0
      %493 = vmatmul.mubr.bf16.gmra.mrb[0].mxu0 %v404
      %v494 = vpop.f32.mrb[0].mxu0
      %v495 = vadd.f32 0.0, %v494
      %v496 = vpop.f32.mrb[0].mxu0
      %v497 = vpop.f32.mrb[0].mxu0
      %v498 = vadd.f32 0.0, %v497
      %v499 = vpop.f32.mrb[0].mxu0
      %500 = vmatprep.mubr.bf16.mxu0 0
      %501 = vmatmul.mubr.bf16.gmra.mrb[0].mxu0 %v407
      %v502 = vpop.f32.mrb[0].mxu0
      %v503 = vadd.f32 0.0, %v502
      %v504 = vpop.f32.mrb[0].mxu0
      %v505 = vpop.f32.mrb[0].mxu0
      %v506 = vadd.f32 0.0, %v505
      %v507 = vpop.f32.mrb[0].mxu0
      %508 = vmatprep.mubr.bf16.mxu0 0
      %509 = vmatmul.mubr.bf16.gmra.mrb[0].mxu0 %v410
      %v510 = vpop.f32.mrb[0].mxu0
      %v511 = vadd.f32 0.0, %v510
      %v512 = vpop.f32.mrb[0].mxu0
      %v513 = vpop.f32.mrb[0].mxu0
      %v514 = vadd.f32 0.0, %v513
      %v515 = vpop.f32.mrb[0].mxu0
      %516 = vmatprep.mubr.bf16.mxu0 0
      %517 = vmatmul.mubr.bf16.gmra.mrb[0].mxu0 %v413
      %v518 = vpop.f32.mrb[0].mxu0
      %v519 = vadd.f32 0.0, %v518
      %v520 = vpop.f32.mrb[0].mxu0
      %v521 = vpop.f32.mrb[0].mxu0
      %v522 = vadd.f32 0.0, %v521
      %v523 = vpop.f32.mrb[0].mxu0
      %524 = vmatprep.mubr.bf16.mxu0 0
      %525 = vmatmul.mubr.bf16.gmra.mrb[0].mxu0 %v416
      %v526 = vpop.f32.mrb[0].mxu0
      %v527 = vadd.f32 0.0, %v526
      %v528 = vpop.f32.mrb[0].mxu0
      %v529 = vpop.f32.mrb[0].mxu0
      %v530 = vadd.f32 0.0, %v529
      %v531 = vpop.f32.mrb[0].mxu0
      %532 = vmatprep.mubr.bf16.mxu0 0
      %533 = vmatmul.mubr.bf16.gmra.mrb[0].mxu0 %v419
      %v534 = vpop.f32.mrb[0].mxu0
      %v535 = vadd.f32 0.0, %v534
      %v536 = vpop.f32.mrb[0].mxu0
      %v537 = vpop.f32.mrb[0].mxu0
      %v538 = vadd.f32 0.0, %v537
      %v539 = vpop.f32.mrb[0].mxu0
      %540 = vmatprep.mubr.bf16.mxu0 0
      %541 = vmatmul.mubr.bf16.gmra.mrb[0].mxu0 %v422
      %v542 = vpop.f32.mrb[0].mxu0
      %v543 = vadd.f32 0.0, %v542
      %v544 = vpop.f32.mrb[0].mxu0
      %v545 = vpop.f32.mrb[0].mxu0
      %v546 = vadd.f32 0.0, %v545
      %v547 = vpop.f32.mrb[0].mxu0
      %548 = vmatprep.mubr.bf16.mxu0 0
      %549 = vmatmul.mubr.bf16.gmra.mrb[0].mxu0 %v425
      %v550 = vpop.f32.mrb[0].mxu0
      %v551 = vadd.f32 0.0, %v550
      %v552 = vpop.f32.mrb[0].mxu0
      %v553 = vpop.f32.mrb[0].mxu0
      %v554 = vadd.f32 0.0, %v553
      %v555 = vpop.f32.mrb[0].mxu0
      %556 = vmatprep.mubr.bf16.mxu0 0
      %557 = vmatmul.mubr.bf16.gmra.mrb[0].mxu0 %v428
      %v558 = vpop.f32.mrb[0].mxu0
      %v559 = vadd.f32 0.0, %v558
      %v560 = vpop.f32.mrb[0].mxu0
      %v561 = vpop.f32.mrb[0].mxu0
      %v562 = vadd.f32 0.0, %v561
      %v563 = vpop.f32.mrb[0].mxu0
      %564 = vmatprep.mubr.bf16.mxu0 0
      %565 = vmatmul.mubr.bf16.gmra.mrb[0].mxu0 %v431
      %v566 = vpop.f32.mrb[0].mxu0
      %v567 = vadd.f32 0.0, %v566
      %v568 = vpop.f32.mrb[0].mxu0
      %v569 = vpop.f32.mrb[0].mxu0
      %v570 = vadd.f32 0.0, %v569
      %v571 = vpop.f32.mrb[0].mxu0
      %572 = vmatprep.mubr.bf16.mxu0 0
      %573 = vmatmul.mubr.bf16.gmra.mrb[0].mxu0 %v434
      %v574 = vpop.f32.mrb[0].mxu0
      %v575 = vadd.f32 0.0, %v574
      %v576 = vpop.f32.mrb[0].mxu0
      %v577 = vpop.f32.mrb[0].mxu0
      %v578 = vadd.f32 0.0, %v577
      %v579 = vpop.f32.mrb[0].mxu0
      %580 = vmatprep.mubr.bf16.mxu0 0
      %581 = vmatmul.mubr.bf16.gmra.mrb[0].mxu0 %v437
      %v582 = vpop.f32.mrb[0].mxu0
      %v583 = vadd.f32 0.0, %v582
      %v584 = vpop.f32.mrb[0].mxu0
      %v585 = vpop.f32.mrb[0].mxu0
      %v586 = vadd.f32 0.0, %v585
      %v587 = vpop.f32.mrb[0].mxu0
      %588 = vmatprep.mubr.bf16.mxu0 0
      %589 = vmatmul.mubr.bf16.gmra.mrb[0].mxu0 %v440
      %v590 = vpop.f32.mrb[0].mxu0
      %v591 = vadd.f32 0.0, %v590
      %v592 = vpop.f32.mrb[0].mxu0
      %v593 = vpop.f32.mrb[0].mxu0
      %v594 = vadd.f32 0.0, %v593
      %v595 = vpop.f32.mrb[0].mxu0
      %596 = vmatprep.mubr.bf16.mxu0 0
      %597 = vmatmul.mubr.bf16.gmra.mrb[0].mxu0 %v443
      %v598 = vpop.f32.mrb[0].mxu0
      %v599 = vadd.f32 0.0, %v598
      %v600 = vpop.f32.mrb[0].mxu0
      %v601 = vpop.f32.mrb[0].mxu0
      %v602 = vadd.f32 0.0, %v601
      %v603 = vpop.f32.mrb[0].mxu0
      %604 = vmatprep.mubr.bf16.mxu0 0
      %605 = vmatmul.mubr.bf16.gmra.mrb[0].mxu0 %v446
      %v606 = vpop.f32.mrb[0].mxu0
      %v607 = vadd.f32 0.0, %v606
      %v608 = vpop.f32.mrb[0].mxu0
      %v609 = vpop.f32.mrb[0].mxu0
      %v610 = vadd.f32 0.0, %v609
      %v611 = vpop.f32.mrb[0].mxu0
      %612 = vdwg.mxu0
      %v613 = vpack.c.bf16 %v490, %v487
      %v614 = vpack.c.bf16 %v498, %v495
      %v615 = vpack.c.bf16 %v506, %v503
      %v616 = vpack.c.bf16 %v514, %v511
      %v617 = vpack.c.bf16 %v522, %v519
      %v618 = vpack.c.bf16 %v530, %v527
      %v619 = vpack.c.bf16 %v538, %v535
      %v620 = vpack.c.bf16 %v546, %v543
      %v621 = vpack.c.bf16 %v554, %v551
      %v622 = vpack.c.bf16 %v562, %v559
      %v623 = vpack.c.bf16 %v570, %v567
      %v624 = vpack.c.bf16 %v578, %v575
      %v625 = vpack.c.bf16 %v586, %v583
      %v626 = vpack.c.bf16 %v594, %v591
      %v627 = vpack.c.bf16 %v602, %v599
      %v628 = vpack.c.bf16 %v610, %v607
      %v645 = vunpack.c.l.b16 %v613
      %v646 = vunpack.c.h.b16 %v613
      %v647 = vunpack.c.l.b16 %v614
      %v648 = vunpack.c.h.b16 %v614
      %v649 = vunpack.c.l.b16 %v615
      %v650 = vunpack.c.h.b16 %v615
      %v651 = vunpack.c.l.b16 %v616
      %v652 = vunpack.c.h.b16 %v616
      %v653 = vunpack.c.l.b16 %v617
      %v654 = vunpack.c.h.b16 %v617
      %v655 = vunpack.c.l.b16 %v618
      %v656 = vunpack.c.h.b16 %v618
      %v657 = vunpack.c.l.b16 %v619
      %v658 = vunpack.c.h.b16 %v619
      %v659 = vunpack.c.l.b16 %v620
      %v660 = vunpack.c.h.b16 %v620
      %v661 = vunpack.c.l.b16 %v621
      %v662 = vunpack.c.h.b16 %v621
      %v663 = vunpack.c.l.b16 %v622
      %v664 = vunpack.c.h.b16 %v622
      %v665 = vunpack.c.l.b16 %v623
      %v666 = vunpack.c.h.b16 %v623
      %v667 = vunpack.c.l.b16 %v624
      %v668 = vunpack.c.h.b16 %v624
      %v669 = vunpack.c.l.b16 %v625
      %v670 = vunpack.c.h.b16 %v625
      %v671 = vunpack.c.l.b16 %v626
      %v672 = vunpack.c.h.b16 %v626
      %v673 = vunpack.c.l.b16 %v627
      %v674 = vunpack.c.h.b16 %v627
      %v675 = vunpack.c.l.b16 %v628
      %v676 = vunpack.c.h.b16 %v628
      %v677 = vpack.c.b16 %v645, %v645
      %v678 = vpack.c.b16 %v646, %v646
      %v679 = vpack.c.b16 %v647, %v647
      %v680 = vpack.c.b16 %v648, %v648
      %v681 = vpack.c.b16 %v649, %v649
      %v682 = vpack.c.b16 %v650, %v650
      %v683 = vpack.c.b16 %v651, %v651
      %v684 = vpack.c.b16 %v652, %v652
      %v685 = vpack.c.b16 %v653, %v653
      %v686 = vpack.c.b16 %v654, %v654
      %v687 = vpack.c.b16 %v655, %v655
      %v688 = vpack.c.b16 %v656, %v656
      %v689 = vpack.c.b16 %v657, %v657
      %v690 = vpack.c.b16 %v658, %v658
      %v691 = vpack.c.b16 %v659, %v659
      %v692 = vpack.c.b16 %v660, %v660
      %v693 = vpack.c.b16 %v661, %v661
      %v694 = vpack.c.b16 %v662, %v662
      %v695 = vpack.c.b16 %v663, %v663
      %v696 = vpack.c.b16 %v664, %v664
      %v697 = vpack.c.b16 %v665, %v665
      %v698 = vpack.c.b16 %v666, %v666
      %v699 = vpack.c.b16 %v667, %v667
      %v700 = vpack.c.b16 %v668, %v668
      %v701 = vpack.c.b16 %v669, %v669
      %v702 = vpack.c.b16 %v670, %v670
      %v703 = vpack.c.b16 %v671, %v671
      %v704 = vpack.c.b16 %v672, %v672
      %v705 = vpack.c.b16 %v673, %v673
      %v706 = vpack.c.b16 %v674, %v674
      %v707 = vpack.c.b16 %v675, %v675
      %v708 = vpack.c.b16 %v676, %v676
      %741 = vst [vmem:[%s272] sm:$0xf] %v677
      %742 = vst [vmem:[%s272 + $0x4] sm:$0xf] %v678
      %743 = vst [vmem:[%s272 + $0x8] sm:$0xf] %v679
      %744 = vst [vmem:[%s272 + $0xc] sm:$0xf] %v680
      %745 = vst [vmem:[%s272 + $0x10] sm:$0xf] %v681
      %746 = vst [vmem:[%s272 + $0x14] sm:$0xf] %v682
      %747 = vst [vmem:[%s272 + $0x18] sm:$0xf] %v683
      %748 = vst [vmem:[%s272 + $0x1c] sm:$0xf] %v684
      %749 = vst [vmem:[%s272 + $0x20] sm:$0xf] %v685
      %750 = vst [vmem:[%s272 + $0x24] sm:$0xf] %v686
      %751 = vst [vmem:[%s272 + $0x28] sm:$0xf] %v687
      %752 = vst [vmem:[%s272 + $0x2c] sm:$0xf] %v688
      %753 = vst [vmem:[%s272 + $0x30] sm:$0xf] %v689
      %754 = vst [vmem:[%s272 + $0x34] sm:$0xf] %v690
      %755 = vst [vmem:[%s272 + $0x38] sm:$0xf] %v691
      %756 = vst [vmem:[%s272 + $0x3c] sm:$0xf] %v692
      %757 = vst [vmem:[%s272 + $0x40] sm:$0xf] %v693
      %758 = vst [vmem:[%s272 + $0x44] sm:$0xf] %v694
      %759 = vst [vmem:[%s272 + $0x48] sm:$0xf] %v695
      %760 = vst [vmem:[%s272 + $0x4c] sm:$0xf] %v696
      %761 = vst [vmem:[%s272 + $0x50] sm:$0xf] %v697
      %762 = vst [vmem:[%s272 + $0x54] sm:$0xf] %v698
      %763 = vst [vmem:[%s272 + $0x58] sm:$0xf] %v699
      %764 = vst [vmem:[%s272 + $0x5c] sm:$0xf] %v700
      %765 = vst [vmem:[%s272 + $0x60] sm:$0xf] %v701
      %766 = vst [vmem:[%s272 + $0x64] sm:$0xf] %v702
      %767 = vst [vmem:[%s272 + $0x68] sm:$0xf] %v703
      %768 = vst [vmem:[%s272 + $0x6c] sm:$0xf] %v704
      %769 = vst [vmem:[%s272 + $0x70] sm:$0xf] %v705
      %770 = vst [vmem:[%s272 + $0x74] sm:$0xf] %v706
      %771 = vst [vmem:[%s272 + $0x78] sm:$0xf] %v707
      %772 = vst [vmem:[%s272 + $0x7c] sm:$0xf] %v708
      %v773 = vld [vmem:[%s2] sm:$0xff]
      %v774 = vld [vmem:[%s2 + $0x8] sm:$0xff]
      %v775 = vld [vmem:[%s2 + $0x10] sm:$0xff]
      %v776 = vld [vmem:[%s2 + $0x18] sm:$0xff]
      %v777 = vld [vmem:[%s2 + $0x20] sm:$0xff]
      %v778 = vld [vmem:[%s2 + $0x28] sm:$0xff]
      %v779 = vld [vmem:[%s2 + $0x30] sm:$0xff]
      %v780 = vld [vmem:[%s2 + $0x38] sm:$0xff]
      %v781 = vld [vmem:[%s2 + $0x40] sm:$0xff]
      %v782 = vld [vmem:[%s2 + $0x48] sm:$0xff]
      %v783 = vld [vmem:[%s2 + $0x50] sm:$0xff]
      %v784 = vld [vmem:[%s2 + $0x58] sm:$0xff]
      %v785 = vld [vmem:[%s2 + $0x60] sm:$0xff]
      %v786 = vld [vmem:[%s2 + $0x68] sm:$0xff]
      %v787 = vld [vmem:[%s2 + $0x70] sm:$0xff]
      %v788 = vld [vmem:[%s2 + $0x78] sm:$0xff]
      %v789 = vld [vmem:[%s2 + $0x80] sm:$0xff]
      %v790 = vld [vmem:[%s2 + $0x88] sm:$0xff]
      %v791 = vld [vmem:[%s2 + $0x90] sm:$0xff]
      %v792 = vld [vmem:[%s2 + $0x98] sm:$0xff]
      %v793 = vld [vmem:[%s2 + $0xa0] sm:$0xff]
      %v794 = vld [vmem:[%s2 + $0xa8] sm:$0xff]
      %v795 = vld [vmem:[%s2 + $0xb0] sm:$0xff]
      %v796 = vld [vmem:[%s2 + $0xb8] sm:$0xff]
      %v797 = vld [vmem:[%s2 + $0xc0] sm:$0xff]
      %v798 = vld [vmem:[%s2 + $0xc8] sm:$0xff]
      %v799 = vld [vmem:[%s2 + $0xd0] sm:$0xff]
      %v800 = vld [vmem:[%s2 + $0xd8] sm:$0xff]
      %v801 = vld [vmem:[%s2 + $0xe0] sm:$0xff]
      %v802 = vld [vmem:[%s2 + $0xe8] sm:$0xff]
      %v803 = vld [vmem:[%s2 + $0xf0] sm:$0xff]
      %v804 = vld [vmem:[%s2 + $0xf8] sm:$0xff]
      %806 = vset.pattern.permute.xlu0 0
      %807 = vperm.xlu0 %806, %v773
      %v808 = vpop.permute.xlu0 %807
      %811 = vset.pattern.permute.xlu0 0
      %812 = vperm.xlu0 %811, %v774
      %v813 = vpop.permute.xlu0 %812
      %816 = vset.pattern.permute.xlu0 0
      %817 = vperm.xlu0 %816, %v775
      %v818 = vpop.permute.xlu0 %817
      %821 = vset.pattern.permute.xlu0 0
      %822 = vperm.xlu0 %821, %v776
      %v823 = vpop.permute.xlu0 %822
      %826 = vset.pattern.permute.xlu0 0
      %827 = vperm.xlu0 %826, %v777
      %v828 = vpop.permute.xlu0 %827
      %831 = vset.pattern.permute.xlu0 0
      %832 = vperm.xlu0 %831, %v778
      %v833 = vpop.permute.xlu0 %832
      %836 = vset.pattern.permute.xlu0 0
      %837 = vperm.xlu0 %836, %v779
      %v838 = vpop.permute.xlu0 %837
      %841 = vset.pattern.permute.xlu0 0
      %842 = vperm.xlu0 %841, %v780
      %v843 = vpop.permute.xlu0 %842
      %846 = vset.pattern.permute.xlu0 0
      %847 = vperm.xlu0 %846, %v781
      %v848 = vpop.permute.xlu0 %847
      %851 = vset.pattern.permute.xlu0 0
      %852 = vperm.xlu0 %851, %v782
      %v853 = vpop.permute.xlu0 %852
      %856 = vset.pattern.permute.xlu0 0
      %857 = vperm.xlu0 %856, %v783
      %v858 = vpop.permute.xlu0 %857
      %861 = vset.pattern.permute.xlu0 0
      %862 = vperm.xlu0 %861, %v784
      %v863 = vpop.permute.xlu0 %862
      %866 = vset.pattern.permute.xlu0 0
      %867 = vperm.xlu0 %866, %v785
      %v868 = vpop.permute.xlu0 %867
      %871 = vset.pattern.permute.xlu0 0
      %872 = vperm.xlu0 %871, %v786
      %v873 = vpop.permute.xlu0 %872
      %876 = vset.pattern.permute.xlu0 0
      %877 = vperm.xlu0 %876, %v787
      %v878 = vpop.permute.xlu0 %877
      %881 = vset.pattern.permute.xlu0 0
      %882 = vperm.xlu0 %881, %v788
      %v883 = vpop.permute.xlu0 %882
      %886 = vset.pattern.permute.xlu0 0
      %887 = vperm.xlu0 %886, %v789
      %v888 = vpop.permute.xlu0 %887
      %891 = vset.pattern.permute.xlu0 0
      %892 = vperm.xlu0 %891, %v790
      %v893 = vpop.permute.xlu0 %892
      %896 = vset.pattern.permute.xlu0 0
      %897 = vperm.xlu0 %896, %v791
      %v898 = vpop.permute.xlu0 %897
      %901 = vset.pattern.permute.xlu0 0
      %902 = vperm.xlu0 %901, %v792
      %v903 = vpop.permute.xlu0 %902
      %906 = vset.pattern.permute.xlu0 0
      %907 = vperm.xlu0 %906, %v793
      %v908 = vpop.permute.xlu0 %907
      %911 = vset.pattern.permute.xlu0 0
      %912 = vperm.xlu0 %911, %v794
      %v913 = vpop.permute.xlu0 %912
      %916 = vset.pattern.permute.xlu0 0
      %917 = vperm.xlu0 %916, %v795
      %v918 = vpop.permute.xlu0 %917
      %921 = vset.pattern.permute.xlu0 0
      %922 = vperm.xlu0 %921, %v796
      %v923 = vpop.permute.xlu0 %922
      %926 = vset.pattern.permute.xlu0 0
      %927 = vperm.xlu0 %926, %v797
      %v928 = vpop.permute.xlu0 %927
      %931 = vset.pattern.permute.xlu0 0
      %932 = vperm.xlu0 %931, %v798
      %v933 = vpop.permute.xlu0 %932
      %936 = vset.pattern.permute.xlu0 0
      %937 = vperm.xlu0 %936, %v799
      %v938 = vpop.permute.xlu0 %937
      %941 = vset.pattern.permute.xlu0 0
      %942 = vperm.xlu0 %941, %v800
      %v943 = vpop.permute.xlu0 %942
      %946 = vset.pattern.permute.xlu0 0
      %947 = vperm.xlu0 %946, %v801
      %v948 = vpop.permute.xlu0 %947
      %951 = vset.pattern.permute.xlu0 0
      %952 = vperm.xlu0 %951, %v802
      %v953 = vpop.permute.xlu0 %952
      %956 = vset.pattern.permute.xlu0 0
      %957 = vperm.xlu0 %956, %v803
      %v958 = vpop.permute.xlu0 %957
      %961 = vset.pattern.permute.xlu0 0
      %962 = vperm.xlu0 %961, %v804
      %v963 = vpop.permute.xlu0 %962
      %v965 = vmul.f32 %v487, %v808
      %v966 = vmul.f32 %v490, %v813
      %v967 = vmul.f32 %v495, %v818
      %v968 = vmul.f32 %v498, %v823
      %v969 = vmul.f32 %v503, %v828
      %v970 = vmul.f32 %v506, %v833
      %v971 = vmul.f32 %v511, %v838
      %v972 = vmul.f32 %v514, %v843
      %v973 = vmul.f32 %v519, %v848
      %v974 = vmul.f32 %v522, %v853
      %v975 = vmul.f32 %v527, %v858
      %v976 = vmul.f32 %v530, %v863
      %v977 = vmul.f32 %v535, %v868
      %v978 = vmul.f32 %v538, %v873
      %v979 = vmul.f32 %v543, %v878
      %v980 = vmul.f32 %v546, %v883
      %v981 = vmul.f32 %v551, %v888
      %v982 = vmul.f32 %v554, %v893
      %v983 = vmul.f32 %v559, %v898
      %v984 = vmul.f32 %v562, %v903
      %v985 = vmul.f32 %v567, %v908
      %v986 = vmul.f32 %v570, %v913
      %v987 = vmul.f32 %v575, %v918
      %v988 = vmul.f32 %v578, %v923
      %v989 = vmul.f32 %v583, %v928
      %v990 = vmul.f32 %v586, %v933
      %v991 = vmul.f32 %v591, %v938
      %v992 = vmul.f32 %v594, %v943
      %v993 = vmul.f32 %v599, %v948
      %v994 = vmul.f32 %v602, %v953
      %v995 = vmul.f32 %v607, %v958
      %v996 = vmul.f32 %v610, %v963
      %v997 = vld [vmem:[%s275] sm:$0x1]
      %v998 = vadd.f32 %v965, %v966
      %v999 = vadd.f32 %v998, %v967
      %v1000 = vadd.f32 %v999, %v968
      %v1001 = vadd.f32 %v1000, %v969
      %v1002 = vadd.f32 %v1001, %v970
      %v1003 = vadd.f32 %v1002, %v971
      %v1004 = vadd.f32 %v1003, %v972
      %v1005 = vadd.f32 %v1004, %v973
      %v1006 = vadd.f32 %v1005, %v974
      %v1007 = vadd.f32 %v1006, %v975
      %v1008 = vadd.f32 %v1007, %v976
      %v1009 = vadd.f32 %v1008, %v977
      %v1010 = vadd.f32 %v1009, %v978
      %v1011 = vadd.f32 %v1010, %v979
      %v1012 = vadd.f32 %v1011, %v980
      %v1013 = vadd.f32 %v1012, %v981
      %v1014 = vadd.f32 %v1013, %v982
      %v1015 = vadd.f32 %v1014, %v983
      %v1016 = vadd.f32 %v1015, %v984
      %v1017 = vadd.f32 %v1016, %v985
      %v1018 = vadd.f32 %v1017, %v986
      %v1019 = vadd.f32 %v1018, %v987
      %v1020 = vadd.f32 %v1019, %v988
      %v1021 = vadd.f32 %v1020, %v989
      %v1022 = vadd.f32 %v1021, %v990
      %v1023 = vadd.f32 %v1022, %v991
      %v1024 = vadd.f32 %v1023, %v992
      %v1025 = vadd.f32 %v1024, %v993
      %v1026 = vadd.f32 %v1025, %v994
      %v1027 = vadd.f32 %v1026, %v995
      %v1028 = vadd.f32 %v1027, %v996
      %v1029 = vrot.slane %v1028, 4
      %v1030 = vadd.f32 %v1028, %v1029
      %v1031 = vrot.slane %v1030, 2
      %v1032 = vadd.f32 %v1030, %v1031
      %v1033 = vrot.slane %v1032, 1
      %v1034 = vadd.f32 %v1032, %v1033
      %v1035 = vadd.f32 %v997, %v1034
      %1036 = vst [vmem:[%s275] sm:$0x1] %v1035
      %v1037 = vld [vmem:[%s278] sm:$0x1]
      %v1038 = vmul.f32 %v965, %v487
      %v1039 = vmul.f32 %v966, %v490
      %v1040 = vmul.f32 %v967, %v495
      %v1041 = vmul.f32 %v968, %v498
      %v1042 = vmul.f32 %v969, %v503
      %v1043 = vmul.f32 %v970, %v506
      %v1044 = vmul.f32 %v971, %v511
      %v1045 = vmul.f32 %v972, %v514
      %v1046 = vmul.f32 %v973, %v519
      %v1047 = vmul.f32 %v974, %v522
      %v1048 = vmul.f32 %v975, %v527
      %v1049 = vmul.f32 %v976, %v530
      %v1050 = vmul.f32 %v977, %v535
      %v1051 = vmul.f32 %v978, %v538
      %v1052 = vmul.f32 %v979, %v543
      %v1053 = vmul.f32 %v980, %v546
      %v1054 = vmul.f32 %v981, %v551
      %v1055 = vmul.f32 %v982, %v554
      %v1056 = vmul.f32 %v983, %v559
      %v1057 = vmul.f32 %v984, %v562
      %v1058 = vmul.f32 %v985, %v567
      %v1059 = vmul.f32 %v986, %v570
      %v1060 = vmul.f32 %v987, %v575
      %v1061 = vmul.f32 %v988, %v578
      %v1062 = vmul.f32 %v989, %v583
      %v1063 = vmul.f32 %v990, %v586
      %v1064 = vmul.f32 %v991, %v591
      %v1065 = vmul.f32 %v992, %v594
      %v1066 = vmul.f32 %v993, %v599
      %v1067 = vmul.f32 %v994, %v602
      %v1068 = vmul.f32 %v995, %v607
      %v1069 = vmul.f32 %v996, %v610
      %v1070 = vadd.f32 %v1038, %v1039
      %v1071 = vadd.f32 %v1070, %v1040
      %v1072 = vadd.f32 %v1071, %v1041
      %v1073 = vadd.f32 %v1072, %v1042
      %v1074 = vadd.f32 %v1073, %v1043
      %v1075 = vadd.f32 %v1074, %v1044
      %v1076 = vadd.f32 %v1075, %v1045
      %v1077 = vadd.f32 %v1076, %v1046
      %v1078 = vadd.f32 %v1077, %v1047
      %v1079 = vadd.f32 %v1078, %v1048
      %v1080 = vadd.f32 %v1079, %v1049
      %v1081 = vadd.f32 %v1080, %v1050
      %v1082 = vadd.f32 %v1081, %v1051
      %v1083 = vadd.f32 %v1082, %v1052
      %v1084 = vadd.f32 %v1083, %v1053
      %v1085 = vadd.f32 %v1084, %v1054
      %v1086 = vadd.f32 %v1085, %v1055
      %v1087 = vadd.f32 %v1086, %v1056
      %v1088 = vadd.f32 %v1087, %v1057
      %v1089 = vadd.f32 %v1088, %v1058
      %v1090 = vadd.f32 %v1089, %v1059
      %v1091 = vadd.f32 %v1090, %v1060
      %v1092 = vadd.f32 %v1091, %v1061
      %v1093 = vadd.f32 %v1092, %v1062
      %v1094 = vadd.f32 %v1093, %v1063
      %v1095 = vadd.f32 %v1094, %v1064
      %v1096 = vadd.f32 %v1095, %v1065
      %v1097 = vadd.f32 %v1096, %v1066
      %v1098 = vadd.f32 %v1097, %v1067
      %v1099 = vadd.f32 %v1098, %v1068
      %v1100 = vadd.f32 %v1099, %v1069
      %v1101 = vrot.slane %v1100, 4
      %v1102 = vadd.f32 %v1100, %v1101
      %v1103 = vrot.slane %v1102, 2
      %v1104 = vadd.f32 %v1102, %v1103
      %v1105 = vrot.slane %v1104, 1
      %v1106 = vadd.f32 %v1104, %v1105
      %v1107 = vadd.f32 %v1037, %v1106
      %1108 = vst [vmem:[%s278] sm:$0x1] %v1107
      %p1109 = scmp.lt.s32.totalorder %s22, 1
      %s1110 = scalar_select %p1109, %s22, 1
      %p1111 = scmp.lt.s32.totalorder %s21, 0
      %s1112 = scalar_select %p1111, %s21, 0
      %s1113 = smul.addr %s1110, 32
      %s1114 = sadd.s32 %s1112, %s1113
      %s1115 = smul.addr %s1114, 4
      %s1116 = scalar_lea.vmem %s3, %s1115
      %p1117 = scmp.lt.s32.totalorder %s21, 0
      %s1118 = scalar_select %p1117, %s21, 0
      %s1119 = scalar_lea.vmem %s4, %s1118
      %p1120 = scmp.lt.s32.totalorder %s21, 0
      %s1121 = scalar_select %p1120, %s21, 0
      %s1122 = scalar_lea.vmem %s5, %s1121
      // Predicated region
      $region37: #{relu_conv_bn.2} parent=31 // pred_check
        %p1123 = pneg %p122
      $region38: #{relu_conv_bn.2} parent=31 // pred_check_branch
        %1125 = sbr.rel (%p1123) target = $region40
      $region39: #{relu_conv_bn.2} parent=31 // pred_region
        _
      $region40: #{relu_conv_bn.2} parent=31 // pred_fallthru
        _
      // Predicated region
      $region41: #{relu_conv_bn.2} parent=31 // pred_check
        %p1126 = pneg %p148
      $region42: #{relu_conv_bn.2} parent=31 // pred_check_branch
        %1128 = sbr.rel (%p1126) target = $region44
      $region43: #{relu_conv_bn.2} parent=31 // pred_region
        _
      $region44: #{relu_conv_bn.2} parent=31 // pred_fallthru
        _
      // Predicated region
      $region45: #{relu_conv_bn.2} parent=31 // pred_check
        %p1129 = pneg %p174
      $region46: #{relu_conv_bn.2} parent=31 // pred_check_branch
        %1131 = sbr.rel (%p1129) target = $region48
      $region47: #{relu_conv_bn.2} parent=31 // pred_region
        _
      $region48: #{relu_conv_bn.2} parent=31 // pred_fallthru
        _
      // Predicated region
      $region49: #{relu_conv_bn.2} parent=31 // pred_check
        %p1132 = pneg %p148
      $region50: #{relu_conv_bn.2} parent=31 // pred_check_branch
        %1134 = sbr.rel (%p1132) target = $region52
      $region51: #{relu_conv_bn.2} parent=31 // pred_region
        %p1135 = scmp.lt.s32.totalorder %s21, 0
        %s1136 = scalar_select %p1135, %s21, 0
        %s1137 = scalar_lea.vmem %s4, %s1136
      $region52: #{relu_conv_bn.2} parent=31 // pred_fallthru
        _
      // Predicated region
      $region53: #{relu_conv_bn.2} parent=31 // pred_check
        %p1138 = pneg %p174
      $region54: #{relu_conv_bn.2} parent=31 // pred_check_branch
        %1140 = sbr.rel (%p1138) target = $region56
      $region55: #{relu_conv_bn.2} parent=31 // pred_region
        %p1141 = scmp.lt.s32.totalorder %s21, 0
        %s1142 = scalar_select %p1141, %s21, 0
        %s1143 = scalar_lea.vmem %s5, %s1142
      $region56: #{relu_conv_bn.2} parent=31 // pred_fallthru
        _
    $region32: #{relu_conv_bn.2} parent=5 // pred_fallthru
      _
    %p1144 = scmp.le.s32.totalorder 2, %s12
    // Predicated region
    $region57: #{relu_conv_bn.2} parent=5 // pred_check
      %p1145 = pneg %p1144
    $region58: #{relu_conv_bn.2} parent=5 // pred_check_branch
      %1147 = sbr.rel (%p1145) target = $region60
    $region59: #{relu_conv_bn.2} parent=5 // pred_region
      %s1148 = ssub.s32 %s12, 2
      // Predicated region
      $region61: #{relu_conv_bn.2} parent=59 // pred_check
        %p1149 = pneg %p128
      $region62: #{relu_conv_bn.2} parent=59 // pred_check_branch
        %1151 = sbr.rel (%p1149) target = $region64
      $region63: #{relu_conv_bn.2} parent=59 // pred_region
        %p1152 = scmp.lt.s32.totalorder %s24, 1
        %s1153 = scalar_select %p1152, %s24, 1
        %p1154 = scmp.lt.s32.totalorder %s23, 0
        %s1155 = scalar_select %p1154, %s23, 0
        %s1156 = smul.addr %s1153, 32
        %s1157 = sadd.s32 %s1155, %s1156
        %s1158 = smul.addr %s1157, 4
        %s1159 = scalar_lea.vmem %s3, %s1158
      $region64: #{relu_conv_bn.2} parent=59 // pred_fallthru
        _
    $region60: #{relu_conv_bn.2} parent=5 // pred_fallthru
      _
  $region6: #{relu_conv_bn.2} parent=0 // loop_footer
    %s16 = sadd.s32 1, %s12
  $region7: #{relu_conv_bn.2} parent=0 // loop_footer_branch
    %11 = sbr.rel target = $region3
  $region8: #{relu_conv_bn.2} parent=0 // loop_exit
    _

</llo_original>
